<compile_context>
chip_gen: v6e
topology: v6e:2x2x1
jax: 0.10.0
libtpu: 0.0.40
codegen_flags: <defaults>
</compile_context>

<pallas_src>
import jax
import jax.numpy as jnp
from jax.experimental import pallas as pl
from jax.experimental.pallas import tpu as pltpu


# ----------------------------------------------------------------------------
# Helpers
# ----------------------------------------------------------------------------
def _gelu(x):
    # tanh-approximate GELU (see TODO above).
    return 0.5 * x * (1.0 + jnp.tanh(0.7978845608028654 * (x + 0.044715 * x * x * x)))


def _pick_row_tile(n):
    """Query-row tile: prefer 256 for large N (v5e/v6e), else 128; must divide N."""
    if n >= 1024:
        for t in (256, 128, 512):
            if n % t == 0:
                return t
    for t in (128, 256, 64, 32, 16):
        if t <= n and n % t == 0:
            return t
    return n


# ----------------------------------------------------------------------------
# Fused offset_attention kernel (tiled over query points, per batch element)
# ----------------------------------------------------------------------------
def _offset_attention_kernel(xf_ref, xt_ref, wall_ref, ball_ref, wt_ref, bt_ref,
                             o_ref, q_ref, acc_ref):
    t = pl.program_id(1)
    nt = pl.num_programs(1)
    c4p = q_ref.shape[0]          # padded q/k channels (>=128)
    c = xf_ref.shape[1]           # channels

    @pl.when(t == 0)
    def _init():
        # Shared q/k projection, computed once per batch element directly in the
        # canonical (K, N) orientation used by the energy matmul, stored bf16.
        x_full = xf_ref[0].astype(jnp.bfloat16)                           # (C, N)
        wq = wall_ref[...][:c4p, :]                                       # (C4P, C)
        q_ref[...] = jax.lax.dot_general(
            wq, x_full, (((1,), (0,)), ((), ())),
            preferred_element_type=jnp.float32).astype(jnp.bfloat16)      # (C4P, N)
        acc_ref[...] = jnp.zeros_like(acc_ref)

    # Fused q + v projection of this tile's points: W_all @ x_tile + b_all.
    # Rows [0, C4P) are q (zero-padded), rows [C4P, C4P+C) are v, row C4P+C is
    # the all-ones row (bias 1, zero weights) that yields the colsum.
    x_tile = xt_ref[0].astype(jnp.bfloat16)                               # (C, TM)
    qv = jax.lax.dot_general(
        wall_ref[...], x_tile, (((1,), (0,)), ((), ())),
        preferred_element_type=jnp.float32) + ball_ref[...]               # (C4P+CV, TM)
    q_tile = qv[:c4p, :].astype(jnp.bfloat16)                             # (C4P, TM)
    v_tile = qv[c4p:, :].astype(jnp.bfloat16)                             # (CV, TM) = [v | 1 | 0]

    # energy[m, n] = q[:, tile_m] . q[:, n]   (k == q: shared conv weight).
    energy = jax.lax.dot_general(
        q_tile, q_ref[...], (((0,), (0,)), ((), ())),
        preferred_element_type=jnp.float32)                               # (TM, N)

    # Row softmax over the key axis (torch softmax(dim=-1)); f32 logits/exp.
    p = jnp.exp(energy - jnp.max(energy, axis=-1, keepdims=True))
    att = (p * pl.reciprocal(jnp.sum(p, axis=-1, keepdims=True),
                             approx=True)).astype(jnp.bfloat16)           # (TM, N)

    # acc[c, n] += sum_m v_aug[c, m] * att[m, n]  (canonical matmul, bf16 ops,
    # f32 accumulation).  The ones-row of v_aug accumulates colsum[n].
    acc_ref[...] += jax.lax.dot_general(
        v_tile, att, (((1,), (0,)), ((), ())),
        preferred_element_type=jnp.float32)                               # (CV, N)

    @pl.when(t == nt - 1)
    def _finalize():
        x_full = xf_ref[0]                                                # (C, N) f32
        acc = acc_ref[...]
        inv_col = pl.reciprocal(1e-9 + acc[c:c + 1, :], approx=True)      # (1, N)
        x_r = acc[:c, :] * inv_col                                        # (C, N)
        u = (x_full - x_r).astype(jnp.bfloat16)
        # trans_conv + (folded, inference-mode) BatchNorm + GELU, then residual.
        y = jax.lax.dot_general(
            wt_ref[...], u, (((1,), (0,)), ((), ())),
            preferred_element_type=jnp.float32) + bt_ref[...]             # (C, N)
        o_ref[0] = x_full + _gelu(y)                                      # lane-dense store


def offset_attention(x, params):
    """Forward of the PyTorch offset_attention module.  x: (B, C, N) -> (B, C, N)."""
    B, C, N = x.shape
    assert C % 4 == 0
    C4 = C // 4
    C4P = ((C4 + 127) // 128) * 128          # q/k channels padded to 128 (zero rows)
    CV = ((C + 1 + 127) // 128) * 128        # v channels + ones row, padded to 128
    tm = _pick_row_tile(N)
    nt = N // tm

    # Fused projection weight/bias: [q (no bias) | pad | v (+bias) | ones | pad].
    w_all = jnp.zeros((C4P + CV, C), jnp.float32)
    w_all = w_all.at[:C4, :].set(params["wq"])
    w_all = w_all.at[C4P:C4P + C, :].set(params["wv"])
    b_all = jnp.zeros((C4P + CV, 1), jnp.float32)
    b_all = b_all.at[C4P:C4P + C, 0].set(params["bv"])
    b_all = b_all.at[C4P + C, 0].set(1.0)

    # trans_conv with BatchNorm folded (inference mode).
    sbn = params["gamma"] * jax.lax.rsqrt(params["var"] + 1e-5)
    wt_bn = params["wt"] * sbn[:, None]
    bt_bn = ((params["bt"] - params["mean"]) * sbn + params["beta"]).reshape(C, 1)

    x = x.astype(jnp.float32)

    # VMEM budget (resident set is O(N), no full-N f32 duplicates) -> fits v7x.
    est = (2 * C * N * 4 +        # x_full block
           2 * C * tm * 4 +       # x_tile blocks (double buffered)
           2 * C * N * 4 +        # output block
           C4P * N * 2 +          # q scratch (bf16)
           CV * N * 4 +           # accumulator scratch
           4 * tm * N * 4)        # energy / p / att temporaries + slack
    vmem_limit = int(min(64 * 1024 * 1024, max(32 * 1024 * 1024, 2 * est)))

    out = pl.pallas_call(
        _offset_attention_kernel,
        out_shape=jax.ShapeDtypeStruct((B, C, N), jnp.float32),
        grid_spec=pltpu.PrefetchScalarGridSpec(
            num_scalar_prefetch=0,
            grid=(B, nt),
            in_specs=[
                pl.BlockSpec((1, C, N), lambda b, t: (b, 0, 0)),        # x (resident / batch)
                pl.BlockSpec((1, C, tm), lambda b, t: (b, 0, t)),       # x tile (this step's points)
                pl.BlockSpec((C4P + CV, C), lambda b, t: (0, 0)),       # fused q/v weight (bf16)
                pl.BlockSpec((C4P + CV, 1), lambda b, t: (0, 0)),       # fused bias (+ ones row)
                pl.BlockSpec((C, C), lambda b, t: (0, 0)),              # trans_conv weight (BN folded)
                pl.BlockSpec((C, 1), lambda b, t: (0, 0)),              # trans_conv bias (BN folded)
            ],
            out_specs=pl.BlockSpec((1, C, N), lambda b, t: (b, 0, 0)),
            scratch_shapes=[
                pltpu.VMEM((C4P, N), jnp.bfloat16),   # resident q (K-major, energy RHS)
                pltpu.VMEM((CV, N), jnp.float32),     # att^T@v accumulator (+ colsum row)
            ],
        ),
        compiler_params=pltpu.CompilerParams(
            dimension_semantics=("parallel", "arbitrary"),
            vmem_limit_bytes=vmem_limit,
        ),
    )(x, x, w_all.astype(jnp.bfloat16), b_all,
      wt_bn.astype(jnp.bfloat16), bt_bn)
    return out


# ----------------------------------------------------------------------------
# Deterministic parameter construction (torch-like raw conv / BN parameters)
# ----------------------------------------------------------------------------
def init_offset_attention_params(key, C):
    ks = jax.random.split(key, 8)
    s = 1.0 / (C ** 0.5)
    return {
        "wq": jax.random.normal(ks[0], (C // 4, C), jnp.float32) * s,   # q_conv == k_conv weight
        "wv": jax.random.normal(ks[1], (C, C), jnp.float32) * s,
        "bv": jax.random.normal(ks[2], (C,), jnp.float32) * 0.05,
        "wt": jax.random.normal(ks[3], (C, C), jnp.float32) * s,
        "bt": jax.random.normal(ks[4], (C,), jnp.float32) * 0.05,
        "gamma": 1.0 + 0.1 * jax.random.normal(ks[5], (C,), jnp.float32),
        "beta": 0.1 * jax.random.normal(ks[6], (C,), jnp.float32),
        "mean": 0.1 * jax.random.normal(ks[7], (C,), jnp.float32),
        "var": jnp.ones((C,), jnp.float32),
    }


# ----------------------------------------------------------------------------
# Pure-JAX f32 reference (mirrors the PyTorch forward, folded BN / tanh GELU)
# ----------------------------------------------------------------------------
def offset_attention_ref(x, p):
    x = x.astype(jnp.float32)                                  # (B, C, N)
    q = jnp.einsum("oc,bcn->bon", p["wq"], x)                  # (B, C/4, N) (k == q)
    energy = jnp.einsum("bom,bon->bmn", q, q)                  # x_q @ x_k
    att = jax.nn.softmax(energy, axis=-1)
    att = att / (1e-9 + jnp.sum(att, axis=1, keepdims=True))   # torch att.sum(dim=1)
    v = jnp.einsum("oc,bcn->bon", p["wv"], x) + p["bv"][None, :, None]
    x_r = jnp.einsum("bcm,bmn->bcn", v, att)                   # torch bmm(x_v, attention)
    sbn = p["gamma"] / jnp.sqrt(p["var"] + 1e-5)
    y = jnp.einsum("oc,bcn->bon", p["wt"], x - x_r) + p["bt"][None, :, None]
    y = (y - p["mean"][None, :, None]) * sbn[None, :, None] + p["beta"][None, :, None]
    return x + _gelu(y)


# ----------------------------------------------------------------------------
if __name__ == "__main__":
    key = jax.random.PRNGKey(0)
    kx, kp = jax.random.split(key)
    B, C, N = 2, 64, 256                      # PyTorch layout: (batch, channels, points)
    x = jax.random.normal(kx, (B, C, N), jnp.float32)
    params = init_offset_attention_params(kp, C)

    fwd = jax.jit(offset_attention)
    out = fwd(x, params)
    jax.block_until_ready(out)

    ref = offset_attention_ref(x, params)
    assert out.shape == (B, C, N)
    assert bool(jnp.all(jnp.isfinite(out)))
    # bf16 MXU operands (incl. softmax logits) + approx EUP reciprocals vs f32 ref.
    max_err = float(jnp.max(jnp.abs(out - ref)))
    assert max_err < 2e-1, f"max abs err vs reference: {max_err}"
    print("KERNEL_OK")
</pallas_src>

<mosaic_0001>
module attributes {stable_mosaic.version = 11 : i64} {
  func.func @_offset_attention_kernel(%arg0: i32, %arg1: i32, %arg2: memref<1x64x256xf32, #tpu.memory_space<vmem>>, %arg3: memref<1x64x128xf32, #tpu.memory_space<vmem>>, %arg4: memref<256x64xbf16, #tpu.memory_space<vmem>>, %arg5: memref<256x1xf32, #tpu.memory_space<vmem>>, %arg6: memref<64x64xbf16, #tpu.memory_space<vmem>>, %arg7: memref<64x1xf32, #tpu.memory_space<vmem>>, %arg8: memref<1x64x256xf32, #tpu.memory_space<vmem>>, %arg9: memref<128x256xbf16, #tpu.memory_space<vmem>>, %arg10: memref<128x256xf32, #tpu.memory_space<vmem>>) attributes {dimension_semantics = [#tpu.dimension_semantics<parallel>, #tpu.dimension_semantics<arbitrary>], iteration_bounds = array<i64: 2, 2>, scalar_prefetch = 0 : i64, scratch_operands = 2 : i64, tpu.core_type = #tpu.core_type<tc>, window_params = [{transform_indices = @transform_0, window_bounds = array<i64: 1, 64, 256>}, {transform_indices = @transform_1, window_bounds = array<i64: 1, 64, 128>}, {pipeline_mode = #tpu.pipeline_mode<synchronous>, transform_indices = @transform_2, window_bounds = array<i64: 256, 64>}, {pipeline_mode = #tpu.pipeline_mode<synchronous>, transform_indices = @transform_3, window_bounds = array<i64: 256, 1>}, {pipeline_mode = #tpu.pipeline_mode<synchronous>, transform_indices = @transform_4, window_bounds = array<i64: 64, 64>}, {pipeline_mode = #tpu.pipeline_mode<synchronous>, transform_indices = @transform_5, window_bounds = array<i64: 64, 1>}, {transform_indices = @transform_6, window_bounds = array<i64: 1, 64, 256>}]} {
    %c0_i32 = arith.constant 0 : i32
    %0 = arith.cmpi eq, %arg1, %c0_i32 : i32
    %1 = arith.extui %0 : i1 to i32
    %c0_i32_0 = arith.constant 0 : i32
    %2 = arith.cmpi ne, %1, %c0_i32_0 : i32
    scf.if %2 {
      %c0_18 = arith.constant 0 : index
      %c0_19 = arith.constant 0 : index
      %c0_20 = arith.constant 0 : index
      %35 = vector.load %arg2[%c0_18, %c0_19, %c0_20] : memref<1x64x256xf32, #tpu.memory_space<vmem>>, vector<1x64x256xf32>
      %36 = vector.shape_cast %35 : vector<1x64x256xf32> to vector<64x256xf32>
      %37 = arith.truncf %36 : vector<64x256xf32> to vector<64x256xbf16>
      %c0_21 = arith.constant 0 : index
      %c0_22 = arith.constant 0 : index
      %38 = vector.load %arg4[%c0_21, %c0_22] : memref<256x64xbf16, #tpu.memory_space<vmem>>, vector<256x64xbf16>
      %39 = vector.extract_strided_slice %38 {offsets = [0, 0], sizes = [128, 64], strides = [1, 1]} : vector<256x64xbf16> to vector<128x64xbf16>
      %cst_23 = arith.constant dense<0.000000e+00> : vector<128x256xf32>
      %40 = tpu.matmul %39, %37, %cst_23 {dimension_numbers = #tpu.dot_dimension_numbers<[1], [0], [0], [1], [0, 0, 1, 1], [], []>} : vector<128x64xbf16>, vector<64x256xbf16>, vector<128x256xf32> -> vector<128x256xf32>
      %41 = arith.truncf %40 : vector<128x256xf32> to vector<128x256xbf16>
      %c0_24 = arith.constant 0 : index
      %c0_25 = arith.constant 0 : index
      %42 = vector.load %arg9[%c0_24, %c0_25] : memref<128x256xbf16, #tpu.memory_space<vmem>>, vector<128x256xbf16>
      tpu.vector_store %arg9[%c0_24, %c0_25], %41 {strides = array<i32>} : memref<128x256xbf16, #tpu.memory_space<vmem>>, vector<128x256xbf16>,
      %cst_26 = arith.constant 0.000000e+00 : f32
      %43 = vector.broadcast %cst_26 : f32 to vector<128x256xf32>
      %c0_27 = arith.constant 0 : index
      %c0_28 = arith.constant 0 : index
      %44 = vector.load %arg10[%c0_27, %c0_28] : memref<128x256xf32, #tpu.memory_space<vmem>>, vector<128x256xf32>
      tpu.vector_store %arg10[%c0_27, %c0_28], %43 {strides = array<i32>} : memref<128x256xf32, #tpu.memory_space<vmem>>, vector<128x256xf32>,
    } else {
    }
    %c0 = arith.constant 0 : index
    %c0_1 = arith.constant 0 : index
    %c0_2 = arith.constant 0 : index
    %3 = vector.load %arg3[%c0, %c0_1, %c0_2] : memref<1x64x128xf32, #tpu.memory_space<vmem>>, vector<1x64x128xf32>
    %4 = vector.shape_cast %3 : vector<1x64x128xf32> to vector<64x128xf32>
    %5 = arith.truncf %4 : vector<64x128xf32> to vector<64x128xbf16>
    %c0_3 = arith.constant 0 : index
    %c0_4 = arith.constant 0 : index
    %6 = vector.load %arg4[%c0_3, %c0_4] : memref<256x64xbf16, #tpu.memory_space<vmem>>, vector<256x64xbf16>
    %cst = arith.constant dense<0.000000e+00> : vector<256x128xf32>
    %7 = tpu.matmul %6, %5, %cst {dimension_numbers = #tpu.dot_dimension_numbers<[1], [0], [0], [1], [0, 0, 1, 1], [], []>} : vector<256x64xbf16>, vector<64x128xbf16>, vector<256x128xf32> -> vector<256x128xf32>
    %c0_5 = arith.constant 0 : index
    %c0_6 = arith.constant 0 : index
    %8 = vector.load %arg5[%c0_5, %c0_6] : memref<256x1xf32, #tpu.memory_space<vmem>>, vector<256x1xf32>
    %9 = vector.broadcast %8 : vector<256x1xf32> to vector<256x128xf32>
    %10 = arith.addf %7, %9 : vector<256x128xf32>
    %11 = vector.extract_strided_slice %10 {offsets = [0, 0], sizes = [128, 128], strides = [1, 1]} : vector<256x128xf32> to vector<128x128xf32>
    %12 = arith.truncf %11 : vector<128x128xf32> to vector<128x128xbf16>
    %13 = vector.extract_strided_slice %10 {offsets = [128, 0], sizes = [128, 128], strides = [1, 1]} : vector<256x128xf32> to vector<128x128xf32>
    %14 = arith.truncf %13 : vector<128x128xf32> to vector<128x128xbf16>
    %c0_7 = arith.constant 0 : index
    %c0_8 = arith.constant 0 : index
    %15 = vector.load %arg9[%c0_7, %c0_8] : memref<128x256xbf16, #tpu.memory_space<vmem>>, vector<128x256xbf16>
    %cst_9 = arith.constant dense<0.000000e+00> : vector<128x256xf32>
    %16 = tpu.matmul %12, %15, %cst_9 {dimension_numbers = #tpu.dot_dimension_numbers<[0], [0], [1], [1], [0, 1, 1, 1], [], []>} : vector<128x128xbf16>, vector<128x256xbf16>, vector<128x256xf32> -> vector<128x256xf32>
    %cst_10 = arith.constant dense<0xFF800000> : vector<128xf32>
    %17 = vector.multi_reduction <maximumf>, %16, %cst_10 [1] : vector<128x256xf32> to vector<128xf32>
    %18 = vector.shape_cast %17 : vector<128xf32> to vector<128x1xf32>
    %19 = vector.broadcast %18 : vector<128x1xf32> to vector<128x256xf32>
    %20 = arith.subf %16, %19 : vector<128x256xf32>
    %21 = math.exp %20 : vector<128x256xf32>
    %cst_11 = arith.constant dense<0.000000e+00> : vector<128xf32>
    %22 = vector.multi_reduction <add>, %21, %cst_11 [1] : vector<128x256xf32> to vector<128xf32>
    %23 = vector.shape_cast %22 : vector<128xf32> to vector<128x1xf32>
    %24 = tpu.reciprocal %23 {approx = true} : vector<128x1xf32> -> vector<128x1xf32>
    %25 = vector.broadcast %24 : vector<128x1xf32> to vector<128x256xf32>
    %26 = arith.mulf %21, %25 : vector<128x256xf32>
    %27 = arith.truncf %26 : vector<128x256xf32> to vector<128x256xbf16>
    %c0_12 = arith.constant 0 : index
    %c0_13 = arith.constant 0 : index
    %28 = vector.load %arg10[%c0_12, %c0_13] : memref<128x256xf32, #tpu.memory_space<vmem>>, vector<128x256xf32>
    %cst_14 = arith.constant dense<0.000000e+00> : vector<128x256xf32>
    %29 = tpu.matmul %14, %27, %cst_14 {dimension_numbers = #tpu.dot_dimension_numbers<[1], [0], [0], [1], [0, 0, 1, 1], [], []>} : vector<128x128xbf16>, vector<128x256xbf16>, vector<128x256xf32> -> vector<128x256xf32>
    %30 = arith.addf %28, %29 : vector<128x256xf32>
    %c0_15 = arith.constant 0 : index
    %c0_16 = arith.constant 0 : index
    %31 = vector.load %arg10[%c0_15, %c0_16] : memref<128x256xf32, #tpu.memory_space<vmem>>, vector<128x256xf32>
    tpu.vector_store %arg10[%c0_15, %c0_16], %30 {strides = array<i32>} : memref<128x256xf32, #tpu.memory_space<vmem>>, vector<128x256xf32>,
    %c1_i32 = arith.constant 1 : i32
    %32 = arith.cmpi eq, %arg1, %c1_i32 : i32
    %33 = arith.extui %32 : i1 to i32
    %c0_i32_17 = arith.constant 0 : i32
    %34 = arith.cmpi ne, %33, %c0_i32_17 : i32
    scf.if %34 {
      %c0_18 = arith.constant 0 : index
      %c0_19 = arith.constant 0 : index
      %c0_20 = arith.constant 0 : index
      %35 = vector.load %arg2[%c0_18, %c0_19, %c0_20] : memref<1x64x256xf32, #tpu.memory_space<vmem>>, vector<1x64x256xf32>
      %36 = vector.shape_cast %35 : vector<1x64x256xf32> to vector<64x256xf32>
      %c0_21 = arith.constant 0 : index
      %c0_22 = arith.constant 0 : index
      %37 = vector.load %arg10[%c0_21, %c0_22] : memref<128x256xf32, #tpu.memory_space<vmem>>, vector<128x256xf32>
      %38 = vector.extract_strided_slice %37 {offsets = [64, 0], sizes = [1, 256], strides = [1, 1]} : vector<128x256xf32> to vector<1x256xf32>
      %cst_23 = arith.constant 9.99999971E-10 : f32
      %39 = vector.broadcast %cst_23 : f32 to vector<1x256xf32>
      %40 = arith.addf %39, %38 : vector<1x256xf32>
      %41 = tpu.reciprocal %40 {approx = true} : vector<1x256xf32> -> vector<1x256xf32>
      %42 = vector.extract_strided_slice %37 {offsets = [0, 0], sizes = [64, 256], strides = [1, 1]} : vector<128x256xf32> to vector<64x256xf32>
      %43 = vector.broadcast %41 : vector<1x256xf32> to vector<64x256xf32>
      %44 = arith.mulf %42, %43 : vector<64x256xf32>
      %45 = arith.subf %36, %44 : vector<64x256xf32>
      %46 = arith.truncf %45 : vector<64x256xf32> to vector<64x256xbf16>
      %c0_24 = arith.constant 0 : index
      %c0_25 = arith.constant 0 : index
      %47 = vector.load %arg6[%c0_24, %c0_25] : memref<64x64xbf16, #tpu.memory_space<vmem>>, vector<64x64xbf16>
      %cst_26 = arith.constant dense<0.000000e+00> : vector<64x256xf32>
      %48 = tpu.matmul %47, %46, %cst_26 {dimension_numbers = #tpu.dot_dimension_numbers<[1], [0], [0], [1], [0, 0, 1, 1], [], []>} : vector<64x64xbf16>, vector<64x256xbf16>, vector<64x256xf32> -> vector<64x256xf32>
      %c0_27 = arith.constant 0 : index
      %c0_28 = arith.constant 0 : index
      %49 = vector.load %arg7[%c0_27, %c0_28] : memref<64x1xf32, #tpu.memory_space<vmem>>, vector<64x1xf32>
      %50 = vector.broadcast %49 : vector<64x1xf32> to vector<64x256xf32>
      %51 = arith.addf %48, %50 : vector<64x256xf32>
      %cst_29 = arith.constant 5.000000e-01 : f32
      %52 = vector.broadcast %cst_29 : f32 to vector<64x256xf32>
      %53 = arith.mulf %52, %51 : vector<64x256xf32>
      %cst_30 = arith.constant 4.471500e-02 : f32
      %54 = vector.broadcast %cst_30 : f32 to vector<64x256xf32>
      %55 = arith.mulf %54, %51 : vector<64x256xf32>
      %56 = arith.mulf %55, %51 : vector<64x256xf32>
      %57 = arith.mulf %56, %51 : vector<64x256xf32>
      %58 = arith.addf %51, %57 : vector<64x256xf32>
      %cst_31 = arith.constant 0.797884583 : f32
      %59 = vector.broadcast %cst_31 : f32 to vector<64x256xf32>
      %60 = arith.mulf %59, %58 : vector<64x256xf32>
      %61 = math.tanh %60 : vector<64x256xf32>
      %cst_32 = arith.constant 1.000000e+00 : f32
      %62 = vector.broadcast %cst_32 : f32 to vector<64x256xf32>
      %63 = arith.addf %62, %61 : vector<64x256xf32>
      %64 = arith.mulf %53, %63 : vector<64x256xf32>
      %65 = arith.addf %36, %64 : vector<64x256xf32>
      %c0_33 = arith.constant 0 : index
      %c0_34 = arith.constant 0 : index
      %c0_35 = arith.constant 0 : index
      %66 = vector.load %arg8[%c0_33, %c0_34, %c0_35] : memref<1x64x256xf32, #tpu.memory_space<vmem>>, vector<1x64x256xf32>
      %67 = vector.shape_cast %66 : vector<1x64x256xf32> to vector<64x256xf32>
      %68 = vector.shape_cast %65 : vector<64x256xf32> to vector<1x64x256xf32>
      tpu.vector_store %arg8[%c0_33, %c0_34, %c0_35], %68 {strides = array<i32>} : memref<1x64x256xf32, #tpu.memory_space<vmem>>, vector<1x64x256xf32>,
    } else {
    }
    return
  }
  func.func @transform_0(%arg0: i32, %arg1: i32) -> (i32, i32, i32) {
    %c0_i32 = arith.constant 0 : i32
    %c0_i32_0 = arith.constant 0 : i32
    %c0_i32_1 = arith.constant 0 : i32
    return %arg0, %c0_i32, %c0_i32_0 : i32, i32, i32
  }
  func.func @transform_1(%arg0: i32, %arg1: i32) -> (i32, i32, i32) {
    %c0_i32 = arith.constant 0 : i32
    %c0_i32_0 = arith.constant 0 : i32
    return %arg0, %c0_i32, %arg1 : i32, i32, i32
  }
  func.func @transform_2(%arg0: i32, %arg1: i32) -> (i32, i32) {
    %c0_i32 = arith.constant 0 : i32
    %c0_i32_0 = arith.constant 0 : i32
    %c0_i32_1 = arith.constant 0 : i32
    return %c0_i32, %c0_i32_0 : i32, i32
  }
  func.func @transform_3(%arg0: i32, %arg1: i32) -> (i32, i32) {
    %c0_i32 = arith.constant 0 : i32
    %c0_i32_0 = arith.constant 0 : i32
    %c0_i32_1 = arith.constant 0 : i32
    return %c0_i32, %c0_i32_0 : i32, i32
  }
  func.func @transform_4(%arg0: i32, %arg1: i32) -> (i32, i32) {
    %c0_i32 = arith.constant 0 : i32
    %c0_i32_0 = arith.constant 0 : i32
    %c0_i32_1 = arith.constant 0 : i32
    return %c0_i32, %c0_i32_0 : i32, i32
  }
  func.func @transform_5(%arg0: i32, %arg1: i32) -> (i32, i32) {
    %c0_i32 = arith.constant 0 : i32
    %c0_i32_0 = arith.constant 0 : i32
    %c0_i32_1 = arith.constant 0 : i32
    return %c0_i32, %c0_i32_0 : i32, i32
  }
  func.func @transform_6(%arg0: i32, %arg1: i32) -> (i32, i32, i32) {
    %c0_i32 = arith.constant 0 : i32
    %c0_i32_0 = arith.constant 0 : i32
    %c0_i32_1 = arith.constant 0 : i32
    return %arg0, %c0_i32, %c0_i32_0 : i32, i32, i32
  }
}

</mosaic_0001>

<llo_original>
// kernel: offset_attention.1
$region0: #{offset_attention.1}
  #allocation0 [shape = 'u32[]', space=smem, size = 0x4, offset = 0x4, fixed_abs, tag = 'smem constant byte address 0x4 - core index']
  #allocation1 [shape = 'u32[144,128]{1,0:T(1,128)}', space=vmem, size = 0x12000, scoped, tag = 'internal scratch']
  #allocation2 [shape = 'bf16[128,256]{1,0:T(8,128)(2,1)}', space=vmem, size = 0x10000, scoped, tag = 'scratch operand']
  #allocation3 [shape = 'f32[128,256]{1,0:T(8,128)}', space=vmem, size = 0x20000, scoped, tag = 'scratch operand']
  %s0 = inlined_call_operand.vmem [shape: f32[2,64,256], index: 0, kind: input, shape index: {}, may-alias: {0,1}]
  %s1 = inlined_call_operand.vmem [shape: f32[2,64,256], index: 1, kind: input, shape index: {}, may-alias: {0,1}]
  %s2 = inlined_call_operand.vmem [shape: bf16[256,64], index: 2, kind: input, shape index: {}]
  %s3 = inlined_call_operand.vmem [shape: f32[256,1], index: 3, kind: input, shape index: {}]
  %s4 = inlined_call_operand.vmem [shape: bf16[64,64], index: 4, kind: input, shape index: {}]
  %s5 = inlined_call_operand.vmem [shape: f32[64,1], index: 5, kind: input, shape index: {}]
  %s6 = inlined_call_operand.hbm [shape: f32[2,64,256], index: 6, kind: output, shape index: {}]
  %s7 = sld [smem:[#allocation0]]
  $region103: #{offset_attention.1} parent=0
    _
  %s9 = ssub.s32 1, %s7
  %s10 = scalar_select 0, %s9, %s7
  $region1: #{offset_attention.1} parent=0
    #allocation4 [shape = 'u8[65536]{0}', space=vmem, size = 0x10000, scoped, tag = 'input window, operand 1']
    #allocation5 [shape = 'u8[131072]{0}', space=vmem, size = 0x20000, scoped, tag = 'output window, operand 0']
    #allocation6 [shape = 's32[2]{0}', space=sflag, size = 0x8, scoped, tag = 'scoped memory for offset_attention.1']
    %11 = vsyncpa [#allocation6], 0
    %s12 = scalar_lea.sflag [#allocation6], 1
    %13 = vsyncpa %s12, 0
    loop: start=0, step=1, limit=6
    $region2: #{offset_attention.1} parent=1 // loop_pre_header
      _
    $region3: #{offset_attention.1} parent=1 // loop_header
      %s15 = sphi 0, %s19
      %p16 = scmp.ge.s32.totalorder %s15, 6
      %s22 = sphi 0, %s34
      %s23 = sphi 0, %s30
      %s24 = sphi 0, %s22
      %s25 = sphi 0, %s23
      %s26 = sphi 0, %s24
      %s27 = sphi 0, %s25
      %s37 = sphi 0, %s39
      %s40 = sphi 0, %s37
      %s41 = sphi 0, %s40
      %s57 = sphi 0, %s41
      %s65 = sphi 0, %s67
      %s68 = sphi 0, %s65
      %s69 = sphi 0, %s68
      %s85 = sphi 0, %s69
      %s89 = sphi 0, %s89
      %s91 = sphi 0, %s89
      %s92 = sphi 0, %s91
      %s106 = sphi 0, %s92
      %s110 = sphi 0, %s110
      %s112 = sphi 0, %s110
      %s113 = sphi 0, %s112
      %s127 = sphi 0, %s113
      %s131 = sphi 0, %s131
      %s133 = sphi 0, %s131
      %s134 = sphi 0, %s133
      %s148 = sphi 0, %s134
      %s152 = sphi 0, %s152
      %s154 = sphi 0, %s152
      %s155 = sphi 0, %s154
      %s169 = sphi 0, %s155
      %s175 = sphi 0, %s177
      %s178 = sphi 0, %s175
      %s179 = sphi 0, %s178
      %s195 = sphi 0, %s179
    $region4: #{offset_attention.1} parent=1 // loop_header_branch
      %18 = sbr.rel (%p16) target = $region8
    $region5: #{offset_attention.1} parent=1 // loop_body
      %s20 = ssub.s32 %s15, 1
      %s21 = ssub.s32 %s15, 2
      %s28 = sadd.s32 1, %s23
      %p29 = scmp.ge.s32.totalorder %s28, 2
      %s30 = scalar_select %p29, 0, %s28
      %s31 = sadd.s32 1, %s22
      %s32 = scalar_select %p29, %s31, %s22
      %p33 = scmp.ge.s32.totalorder %s32, 2
      %s34 = scalar_select %p33, 0, %s32
      %s35 = ssub.s32 %s22, %s34
      %p36 = scmp.eq.s32.totalorder %s35, 0
      %s38 = sadd.s32 %s37, 1
      %s39 = scalar_select %p36, %s37, %s38
      %p42 = pneg %p36
      %p43 = scmp.eq.s32.totalorder %s15, 3
      %p44 = por %p42, %p43
      %p45 = scmp.ne.s32.totalorder %s37, %s40
      %p46 = scmp.eq.s32.totalorder %s15, 0
      %p47 = por %p45, %p46
      %p48 = scmp.ne.s32.totalorder %s37, %s40
      %p49 = scmp.eq.s32.totalorder %s20, 3
      %p50 = por %p48, %p49
      %p51 = scmp.ne.s32.totalorder %s40, %s41
      %p52 = scmp.eq.s32.totalorder %s20, 0
      %p53 = por %p51, %p52
      %p54 = scmp.ne.s32.totalorder %s40, %s41
      %p55 = scmp.eq.s32.totalorder %s21, 3
      %p56 = por %p54, %p55
      %p58 = scmp.ne.s32.totalorder %s41, %s57
      %p59 = scmp.eq.s32.totalorder %s21, 0
      %p60 = por %p58, %p59
      %s61 = ssub.s32 %s22, %s34
      %s62 = ssub.s32 %s23, %s30
      %s63 = sor.u32 %s61, %s62
      %p64 = scmp.eq.s32.totalorder %s63, 0
      %s66 = sadd.s32 %s65, 1
      %s67 = scalar_select %p64, %s65, %s66
      %p70 = pneg %p64
      %p71 = scmp.eq.s32.totalorder %s15, 3
      %p72 = por %p70, %p71
      %p73 = scmp.ne.s32.totalorder %s65, %s68
      %p74 = scmp.eq.s32.totalorder %s15, 0
      %p75 = por %p73, %p74
      %p76 = scmp.ne.s32.totalorder %s65, %s68
      %p77 = scmp.eq.s32.totalorder %s20, 3
      %p78 = por %p76, %p77
      %p79 = scmp.ne.s32.totalorder %s68, %s69
      %p80 = scmp.eq.s32.totalorder %s20, 0
      %p81 = por %p79, %p80
      %p82 = scmp.ne.s32.totalorder %s68, %s69
      %p83 = scmp.eq.s32.totalorder %s21, 3
      %p84 = por %p82, %p83
      %p86 = scmp.ne.s32.totalorder %s69, %s85
      %p87 = scmp.eq.s32.totalorder %s21, 0
      %p88 = por %p86, %p87
      %s90 = sadd.s32 %s89, 1
      %p93 = scmp.eq.s32.totalorder %s15, 3
      %p94 = scmp.ne.s32.totalorder %s89, %s91
      %p95 = scmp.eq.s32.totalorder %s15, 0
      %p96 = por %p94, %p95
      %p97 = scmp.ne.s32.totalorder %s89, %s91
      %p98 = scmp.eq.s32.totalorder %s20, 3
      %p99 = por %p97, %p98
      %p100 = scmp.ne.s32.totalorder %s91, %s92
      %p101 = scmp.eq.s32.totalorder %s20, 0
      %p102 = por %p100, %p101
      %p103 = scmp.ne.s32.totalorder %s91, %s92
      %p104 = scmp.eq.s32.totalorder %s21, 3
      %p105 = por %p103, %p104
      %p107 = scmp.ne.s32.totalorder %s92, %s106
      %p108 = scmp.eq.s32.totalorder %s21, 0
      %p109 = por %p107, %p108
      %s111 = sadd.s32 %s110, 1
      %p114 = scmp.eq.s32.totalorder %s15, 3
      %p115 = scmp.ne.s32.totalorder %s110, %s112
      %p116 = scmp.eq.s32.totalorder %s15, 0
      %p117 = por %p115, %p116
      %p118 = scmp.ne.s32.totalorder %s110, %s112
      %p119 = scmp.eq.s32.totalorder %s20, 3
      %p120 = por %p118, %p119
      %p121 = scmp.ne.s32.totalorder %s112, %s113
      %p122 = scmp.eq.s32.totalorder %s20, 0
      %p123 = por %p121, %p122
      %p124 = scmp.ne.s32.totalorder %s112, %s113
      %p125 = scmp.eq.s32.totalorder %s21, 3
      %p126 = por %p124, %p125
      %p128 = scmp.ne.s32.totalorder %s113, %s127
      %p129 = scmp.eq.s32.totalorder %s21, 0
      %p130 = por %p128, %p129
      %s132 = sadd.s32 %s131, 1
      %p135 = scmp.eq.s32.totalorder %s15, 3
      %p136 = scmp.ne.s32.totalorder %s131, %s133
      %p137 = scmp.eq.s32.totalorder %s15, 0
      %p138 = por %p136, %p137
      %p139 = scmp.ne.s32.totalorder %s131, %s133
      %p140 = scmp.eq.s32.totalorder %s20, 3
      %p141 = por %p139, %p140
      %p142 = scmp.ne.s32.totalorder %s133, %s134
      %p143 = scmp.eq.s32.totalorder %s20, 0
      %p144 = por %p142, %p143
      %p145 = scmp.ne.s32.totalorder %s133, %s134
      %p146 = scmp.eq.s32.totalorder %s21, 3
      %p147 = por %p145, %p146
      %p149 = scmp.ne.s32.totalorder %s134, %s148
      %p150 = scmp.eq.s32.totalorder %s21, 0
      %p151 = por %p149, %p150
      %s153 = sadd.s32 %s152, 1
      %p156 = scmp.eq.s32.totalorder %s15, 3
      %p157 = scmp.ne.s32.totalorder %s152, %s154
      %p158 = scmp.eq.s32.totalorder %s15, 0
      %p159 = por %p157, %p158
      %p160 = scmp.ne.s32.totalorder %s152, %s154
      %p161 = scmp.eq.s32.totalorder %s20, 3
      %p162 = por %p160, %p161
      %p163 = scmp.ne.s32.totalorder %s154, %s155
      %p164 = scmp.eq.s32.totalorder %s20, 0
      %p165 = por %p163, %p164
      %p166 = scmp.ne.s32.totalorder %s154, %s155
      %p167 = scmp.eq.s32.totalorder %s21, 3
      %p168 = por %p166, %p167
      %p170 = scmp.ne.s32.totalorder %s155, %s169
      %p171 = scmp.eq.s32.totalorder %s21, 0
      %p172 = por %p170, %p171
      %s173 = ssub.s32 %s22, %s34
      %p174 = scmp.eq.s32.totalorder %s173, 0
      %s176 = sadd.s32 %s175, 1
      %s177 = scalar_select %p174, %s175, %s176
      %p180 = pneg %p174
      %p181 = scmp.eq.s32.totalorder %s15, 3
      %p182 = por %p180, %p181
      %p183 = scmp.ne.s32.totalorder %s175, %s178
      %p184 = scmp.eq.s32.totalorder %s15, 0
      %p185 = por %p183, %p184
      %p186 = scmp.ne.s32.totalorder %s175, %s178
      %p187 = scmp.eq.s32.totalorder %s20, 3
      %p188 = por %p186, %p187
      %p189 = scmp.ne.s32.totalorder %s178, %s179
      %p190 = scmp.eq.s32.totalorder %s20, 0
      %p191 = por %p189, %p190
      %p192 = scmp.ne.s32.totalorder %s178, %s179
      %p193 = scmp.eq.s32.totalorder %s21, 3
      %p194 = por %p192, %p193
      %p196 = scmp.ne.s32.totalorder %s179, %s195
      %p197 = scmp.eq.s32.totalorder %s21, 0
      %p198 = por %p196, %p197
      %p199 = scmp.le.s32.totalorder 1, %s15
      %p200 = scmp.lt.s32.totalorder %s15, 5
      %p201 = pnand %p199, %p200
      %p202 = pneg %p201
      // Predicated region
      $region9: #{offset_attention.1} parent=5 // pred_check
        _
      $region10: #{offset_attention.1} parent=5 // pred_check_branch
        %204 = sbr.rel (%p201) target = $region12
      $region11: #{offset_attention.1} parent=5 // pred_region
        %s205 = ssub.s32 %s15, 1
        // Predicated region
        $region13: #{offset_attention.1} parent=11 // pred_check
          %p206 = pneg %p102
        $region14: #{offset_attention.1} parent=11 // pred_check_branch
          %208 = sbr.rel (%p206) target = $region16
        $region15: #{offset_attention.1} parent=11 // pred_region
          _
        $region16: #{offset_attention.1} parent=11 // pred_fallthru
          _
        // Predicated region
        $region17: #{offset_attention.1} parent=11 // pred_check
          %p209 = pneg %p123
        $region18: #{offset_attention.1} parent=11 // pred_check_branch
          %211 = sbr.rel (%p209) target = $region20
        $region19: #{offset_attention.1} parent=11 // pred_region
          _
        $region20: #{offset_attention.1} parent=11 // pred_fallthru
          _
        // Predicated region
        $region21: #{offset_attention.1} parent=11 // pred_check
          %p212 = pneg %p144
        $region22: #{offset_attention.1} parent=11 // pred_check_branch
          %214 = sbr.rel (%p212) target = $region24
        $region23: #{offset_attention.1} parent=11 // pred_region
          _
        $region24: #{offset_attention.1} parent=11 // pred_fallthru
          _
        // Predicated region
        $region25: #{offset_attention.1} parent=11 // pred_check
          %p215 = pneg %p165
        $region26: #{offset_attention.1} parent=11 // pred_check_branch
          %217 = sbr.rel (%p215) target = $region28
        $region27: #{offset_attention.1} parent=11 // pred_region
          _
        $region28: #{offset_attention.1} parent=11 // pred_fallthru
          _
      $region12: #{offset_attention.1} parent=5 // pred_fallthru
        _
      %p218 = scmp.lt.s32.totalorder %s15, 4
      // Predicated region
      $region29: #{offset_attention.1} parent=5 // pred_check
        %p219 = pneg %p218
      $region30: #{offset_attention.1} parent=5 // pred_check_branch
        %221 = sbr.rel (%p219) target = $region32
      $region31: #{offset_attention.1} parent=5 // pred_region
        // Predicated region
        $region33: #{offset_attention.1} parent=31 // pred_check
          %p222 = pneg %p47
        $region34: #{offset_attention.1} parent=31 // pred_check_branch
          %224 = sbr.rel (%p222) target = $region36
        $region35: #{offset_attention.1} parent=31 // pred_region
          %p225 = scmp.lt.s32.totalorder %s22, 1
          %s226 = scalar_select %p225, %s22, 1
          %s227 = smul.addr %s226, 16
          %s228 = smul.addr %s227, 8
          %s229 = scalar_lea.vmem %s0, %s228
        $region36: #{offset_attention.1} parent=31 // pred_fallthru
          _
        // Predicated region
        $region37: #{offset_attention.1} parent=31 // pred_check
          %p230 = pneg %p75
        $region38: #{offset_attention.1} parent=31 // pred_check_branch
          %232 = sbr.rel (%p230) target = $region40
        $region39: #{offset_attention.1} parent=31 // pred_region
          %s233 = sand.u32 %s65, 1
          %s234 = sand.u32 %s65, 1
          %s235 = smul.addr %s234, 64
          %s236 = scalar_lea.vmem [#allocation4], %s235
          %s237 = smul.addr %s22, 16
          %s238 = sadd.s32 %s23, %s237
          %s239 = smul.addr %s238, 8
          %s240 = scalar_lea.vmem %s1, %s239
          // Predicated region
          $region41: #{offset_attention.1} parent=39 // pred_check
            _
          $region42: #{offset_attention.1} parent=39 // pred_check_branch
            %242 = sbr.rel (0) target = $region44
          $region43: #{offset_attention.1} parent=39 // pred_region
            // Predicated region
            $region45: #{offset_attention.1} parent=43 // pred_check
              _
            $region46: #{offset_attention.1} parent=43 // pred_check_branch
              %244 = sbr.rel (0) target = $region48
            $region47: #{offset_attention.1} parent=43 // pred_region
              // Predicated region
              $region60: #{offset_attention.1} parent=47 // pred_check
                _
              $region61: #{offset_attention.1} parent=47 // pred_check_branch
                %274 = sbr.rel (0) target = $region63
              $region62: #{offset_attention.1} parent=47 // pred_region
                loop: start=0, step=1, limit=1
                $region64: #{offset_attention.1} parent=62 // loop_pre_header
                  _
                $region65: #{offset_attention.1} parent=62 // loop_header
                  %s276 = sphi 0, %s280
                  %p277 = scmp.ge.s32.totalorder %s276, 1
                  %s281 = sphi %s240, %s240
                  %s282 = sphi %s236, %s236
                $region66: #{offset_attention.1} parent=62 // loop_header_branch
                  %279 = sbr.rel (%p277) target = $region70
                $region67: #{offset_attention.1} parent=62 // loop_body
                  %v283 = vld [vmem:[%s281] sm:$0xff]
                  %284 = vst [vmem:[%s282] sm:$0xff] %v283
                  %v285 = vld [vmem:[%s281 + $0x10] sm:$0xff]
                  %286 = vst [vmem:[%s282 + $0x8] sm:$0xff] %v285
                  %v287 = vld [vmem:[%s281 + $0x20] sm:$0xff]
                  %288 = vst [vmem:[%s282 + $0x10] sm:$0xff] %v287
                  %v289 = vld [vmem:[%s281 + $0x30] sm:$0xff]
                  %290 = vst [vmem:[%s282 + $0x18] sm:$0xff] %v289
                  %v291 = vld [vmem:[%s281 + $0x40] sm:$0xff]
                  %292 = vst [vmem:[%s282 + $0x20] sm:$0xff] %v291
                  %v293 = vld [vmem:[%s281 + $0x50] sm:$0xff]
                  %294 = vst [vmem:[%s282 + $0x28] sm:$0xff] %v293
                  %v295 = vld [vmem:[%s281 + $0x60] sm:$0xff]
                  %296 = vst [vmem:[%s282 + $0x30] sm:$0xff] %v295
                  %v297 = vld [vmem:[%s281 + $0x70] sm:$0xff]
                  %298 = vst [vmem:[%s282 + $0x38] sm:$0xff] %v297
                $region68: #{offset_attention.1} parent=62 // loop_footer
                  %s280 = sadd.s32 1, %s276
                $region69: #{offset_attention.1} parent=62 // loop_footer_branch
                  %275 = sbr.rel target = $region65
                $region70: #{offset_attention.1} parent=62 // loop_exit
                  _
              $region63: #{offset_attention.1} parent=47 // pred_fallthru
                _
              // Predicated region
              $region71: #{offset_attention.1} parent=47 // pred_check
                _
              $region72: #{offset_attention.1} parent=47 // pred_check_branch
                %300 = sbr.rel target = $region74
              $region73: #{offset_attention.1} parent=47 // pred_region
                _
              $region74: #{offset_attention.1} parent=47 // pred_fallthru
                _
            $region48: #{offset_attention.1} parent=43 // pred_fallthru
              _
            // Predicated region
            $region49: #{offset_attention.1} parent=43 // pred_check
              _
            $region50: #{offset_attention.1} parent=43 // pred_check_branch
              %246 = sbr.rel target = $region52
            $region51: #{offset_attention.1} parent=43 // pred_region
              %s248 = ssub.s32 256, 1
              loop: start=0, step=1, limit=1
              $region53: #{offset_attention.1} parent=51 // loop_pre_header
                _
              $region54: #{offset_attention.1} parent=51 // loop_header
                %s250 = sphi 0, %s254
                %p251 = scmp.ge.s32.totalorder %s250, 1
                %s255 = sphi %s240, %s240
                %s256 = sphi %s236, %s236
              $region55: #{offset_attention.1} parent=51 // loop_header_branch
                %253 = sbr.rel (%p251) target = $region59
              $region56: #{offset_attention.1} parent=51 // loop_body
                %v257 = vld [vmem:[%s255] sm:%s248]
                %258 = vst [vmem:[%s256] sm:%s248] %v257
                %v259 = vld [vmem:[%s255 + $0x10] sm:%s248]
                %260 = vst [vmem:[%s256 + $0x8] sm:%s248] %v259
                %v261 = vld [vmem:[%s255 + $0x20] sm:%s248]
                %262 = vst [vmem:[%s256 + $0x10] sm:%s248] %v261
                %v263 = vld [vmem:[%s255 + $0x30] sm:%s248]
                %264 = vst [vmem:[%s256 + $0x18] sm:%s248] %v263
                %v265 = vld [vmem:[%s255 + $0x40] sm:%s248]
                %266 = vst [vmem:[%s256 + $0x20] sm:%s248] %v265
                %v267 = vld [vmem:[%s255 + $0x50] sm:%s248]
                %268 = vst [vmem:[%s256 + $0x28] sm:%s248] %v267
                %v269 = vld [vmem:[%s255 + $0x60] sm:%s248]
                %270 = vst [vmem:[%s256 + $0x30] sm:%s248] %v269
                %v271 = vld [vmem:[%s255 + $0x70] sm:%s248]
                %272 = vst [vmem:[%s256 + $0x38] sm:%s248] %v271
              $region57: #{offset_attention.1} parent=51 // loop_footer
                %s254 = sadd.s32 1, %s250
              $region58: #{offset_attention.1} parent=51 // loop_footer_branch
                %249 = sbr.rel target = $region54
              $region59: #{offset_attention.1} parent=51 // loop_exit
                _
            $region52: #{offset_attention.1} parent=43 // pred_fallthru
              _
          $region44: #{offset_attention.1} parent=39 // pred_fallthru
            _
          %301 = vnop
        $region40: #{offset_attention.1} parent=31 // pred_fallthru
          _
      $region32: #{offset_attention.1} parent=5 // pred_fallthru
        _
      %p302 = scmp.le.s32.totalorder 1, %s15
      %p303 = scmp.lt.s32.totalorder %s15, 5
      %p304 = pnand %p302, %p303
      %p305 = pneg %p304
      // Predicated region
      $region75: #{offset_attention.1} parent=5 // pred_check
        _
      $region76: #{offset_attention.1} parent=5 // pred_check_branch
        %307 = sbr.rel (%p304) target = $region78
      $region77: #{offset_attention.1} parent=5 // pred_region
        %s308 = ssub.s32 %s15, 1
        %s309 = sand.u32 %s68, 1
        %s310 = sand.u32 %s68, 1
        %s311 = smul.addr %s310, 64
        %s312 = scalar_lea.vmem [#allocation4], %s311
        // Predicated region
        $region79: #{offset_attention.1} parent=77 // pred_check
          %p313 = pneg %p81
        $region80: #{offset_attention.1} parent=77 // pred_check_branch
          %315 = sbr.rel (%p313) target = $region82
        $region81: #{offset_attention.1} parent=77 // pred_region
          _
        $region82: #{offset_attention.1} parent=77 // pred_fallthru
          _
        %p316 = scmp.lt.s32.totalorder %s24, 1
        %s317 = scalar_select %p316, %s24, 1
        %s318 = smul.addr %s317, 16
        %s319 = smul.addr %s318, 8
        %s320 = scalar_lea.vmem %s0, %s319
        %p321 = pneg %p53
        %p322 = pneg %p50
        %s323 = sand.u32 %s68, 1
        %s324 = sand.u32 %s68, 1
        %s325 = smul.addr %s324, 64
        %s326 = scalar_lea.vmem [#allocation4], %s325
        %p327 = pneg %p81
        %p328 = pneg %p78
        %p329 = pneg %p102
        %p330 = pneg %p99
        %p331 = pneg %p123
        %p332 = pneg %p120
        %p333 = pneg %p144
        %p334 = pneg %p141
        %p335 = pneg %p165
        %p336 = pneg %p162
        %p337 = pneg %p191
        %p338 = pneg %p188
        %s339 = sand.u32 %s178, 1
        %s340 = scalar_lea.sflag [#allocation6], %s339
        %s341 = sand.u32 %s178, 1
        %s342 = smul.addr %s341, 128
        %s343 = scalar_lea.vmem [#allocation5], %s342
        %p344 = scmp.lt.s32.totalorder %s24, 1
        %s345 = scalar_select %p344, %s24, 1
        %s346 = smul.addr %s345, 16
        %s347 = smul.addr %s346, 8
        %s348 = scalar_lea.vmem %s0, %s347
        %p350 = scmp.eq.s32.totalorder %s25, 0
        // Predicated region
        $region83: #{offset_attention.1} parent=77 // pred_check
          %p351 = pneg %p350
        $region84: #{offset_attention.1} parent=77 // pred_check_branch
          %353 = sbr.rel (%p351) target = $region86
        $region85: #{offset_attention.1} parent=77 // pred_region
          %v354 = vld [vmem:[%s348] sm:$0xff]
          %v355 = vld [vmem:[%s348 + $0x8] sm:$0xff]
          %v356 = vld [vmem:[%s348 + $0x10] sm:$0xff]
          %v357 = vld [vmem:[%s348 + $0x18] sm:$0xff]
          %v358 = vld [vmem:[%s348 + $0x20] sm:$0xff]
          %v359 = vld [vmem:[%s348 + $0x28] sm:$0xff]
          %v360 = vld [vmem:[%s348 + $0x30] sm:$0xff]
          %v361 = vld [vmem:[%s348 + $0x38] sm:$0xff]
          %v362 = vld [vmem:[%s348 + $0x40] sm:$0xff]
          %v363 = vld [vmem:[%s348 + $0x48] sm:$0xff]
          %v364 = vld [vmem:[%s348 + $0x50] sm:$0xff]
          %v365 = vld [vmem:[%s348 + $0x58] sm:$0xff]
          %v366 = vld [vmem:[%s348 + $0x60] sm:$0xff]
          %v367 = vld [vmem:[%s348 + $0x68] sm:$0xff]
          %v368 = vld [vmem:[%s348 + $0x70] sm:$0xff]
          %v369 = vld [vmem:[%s348 + $0x78] sm:$0xff]
          %v370 = vpack.c.bf16 %v356, %v354
          %v371 = vpack.c.bf16 %v357, %v355
          %v372 = vpack.c.bf16 %v360, %v358
          %v373 = vpack.c.bf16 %v361, %v359
          %v374 = vpack.c.bf16 %v364, %v362
          %v375 = vpack.c.bf16 %v365, %v363
          %v376 = vpack.c.bf16 %v368, %v366
          %v377 = vpack.c.bf16 %v369, %v367
          %v378 = vld [vmem:[%s2] sm:$0xf]
          %v379 = vld [vmem:[%s2 + $0x4] sm:$0xf]
          %v380 = vld [vmem:[%s2 + $0x8] sm:$0xf]
          %v381 = vld [vmem:[%s2 + $0xc] sm:$0xf]
          %v382 = vld [vmem:[%s2 + $0x10] sm:$0xf]
          %v383 = vld [vmem:[%s2 + $0x14] sm:$0xf]
          %v384 = vld [vmem:[%s2 + $0x18] sm:$0xf]
          %v385 = vld [vmem:[%s2 + $0x1c] sm:$0xf]
          %v386 = vld [vmem:[%s2 + $0x20] sm:$0xf]
          %v387 = vld [vmem:[%s2 + $0x24] sm:$0xf]
          %v388 = vld [vmem:[%s2 + $0x28] sm:$0xf]
          %v389 = vld [vmem:[%s2 + $0x2c] sm:$0xf]
          %v390 = vld [vmem:[%s2 + $0x30] sm:$0xf]
          %v391 = vld [vmem:[%s2 + $0x34] sm:$0xf]
          %v392 = vld [vmem:[%s2 + $0x38] sm:$0xf]
          %v393 = vld [vmem:[%s2 + $0x3c] sm:$0xf]
          %v410 = vunpack.c.l.b16 %v378
          %v411 = vunpack.c.l.b16 %v379
          %v412 = vunpack.c.l.b16 %v380
          %v413 = vunpack.c.l.b16 %v381
          %v414 = vunpack.c.l.b16 %v382
          %v415 = vunpack.c.l.b16 %v383
          %v416 = vunpack.c.l.b16 %v384
          %v417 = vunpack.c.l.b16 %v385
          %v418 = vunpack.c.l.b16 %v386
          %v419 = vunpack.c.l.b16 %v387
          %v420 = vunpack.c.l.b16 %v388
          %v421 = vunpack.c.l.b16 %v389
          %v422 = vunpack.c.l.b16 %v390
          %v423 = vunpack.c.l.b16 %v391
          %v424 = vunpack.c.l.b16 %v392
          %v425 = vunpack.c.l.b16 %v393
          %v426 = vpack.c.b16 %v411, %v410
          %v427 = vpack.c.b16 %v413, %v412
          %v428 = vpack.c.b16 %v415, %v414
          %v429 = vpack.c.b16 %v417, %v416
          %v430 = vpack.c.b16 %v419, %v418
          %v431 = vpack.c.b16 %v421, %v420
          %v432 = vpack.c.b16 %v423, %v422
          %v433 = vpack.c.b16 %v425, %v424
          %vm434 = vcmask 523264
          %v436 = vsel %vm434, %v426, 0
          %v439 = vsel %vm434, %v427, 0
          %v442 = vsel %vm434, %v428, 0
          %v445 = vsel %vm434, %v429, 0
          %v448 = vsel %vm434, %v430, 0
          %v451 = vsel %vm434, %v431, 0
          %v454 = vsel %vm434, %v432, 0
          %v457 = vsel %vm434, %v433, 0
          %459 = vmatprep.subr.bf16.mxu0 0
          %460 = vmatpush1.bf16.msra.mxu0 0
          %461 = vmatprep.subr.bf16.mxu0 0
          %462 = vmatpush1.bf16.msra.mxu0 0
          %463 = vmatprep.subr.bf16.mxu0 0
          %464 = vmatpush1.bf16.msra.mxu0 0
          %465 = vmatprep.subr.bf16.mxu0 0
          %466 = vmatpush1.bf16.msra.mxu0 0
          %467 = vmatprep.subr.bf16.mxu0 %v377
          %468 = vmatpush1.bf16.msra.mxu0 %v376
          %469 = vmatprep.subr.bf16.mxu0 %v375
          %470 = vmatpush1.bf16.msra.mxu0 %v374
          %471 = vmatprep.subr.bf16.mxu0 %v373
          %472 = vmatpush1.bf16.msra.mxu0 %v372
          %473 = vmatprep.subr.bf16.mxu0 %v371
          %474 = vmatpush1.bf16.msra.mxu0 %v370
          %475 = vmatprep.subr.bf16.mxu0 0
          %476 = vmatpush2.bf16.msra.mxu0 0
          %477 = vmatprep.subr.bf16.mxu0 0
          %478 = vmatpush2.bf16.msra.mxu0 0
          %479 = vmatprep.subr.bf16.mxu0 0
          %480 = vmatpush2.bf16.msra.mxu0 0
          %481 = vmatprep.subr.bf16.mxu0 0
          %482 = vmatpush2.bf16.msra.mxu0 0
          %483 = vmatprep.subr.bf16.mxu0 0
          %484 = vmatpush2.bf16.msra.mxu0 0
          %485 = vmatprep.subr.bf16.mxu0 0
          %486 = vmatpush2.bf16.msra.mxu0 0
          %487 = vmatprep.subr.bf16.mxu0 0
          %488 = vmatpush2.bf16.msra.mxu0 0
          %489 = vmatprep.subr.bf16.mxu0 0
          %490 = vmatpush2.bf16.msra.mxu0 0
          %491 = vmatprep.mubr.bf16.mxu0 0
          %492 = vmatmul.mubr.bf16.gmra.mxu0 %v436
          %v493 = vpop.f32.mrf.mxu0
          %v494 = vadd.f32 0.0, %v493
          %v495 = vpop.f32.mrf.mxu0
          %v496 = vadd.f32 0.0, %v495
          %v497 = vpop.f32.mrf.mxu0
          %v498 = vadd.f32 0.0, %v497
          %v499 = vpop.f32.mrf.mxu0
          %v500 = vadd.f32 0.0, %v499
          %501 = vmatprep.mubr.bf16.mxu0 0
          %502 = vmatmul.mubr.bf16.gmra.mxu0 %v439
          %v503 = vpop.f32.mrf.mxu0
          %v504 = vadd.f32 0.0, %v503
          %v505 = vpop.f32.mrf.mxu0
          %v506 = vadd.f32 0.0, %v505
          %v507 = vpop.f32.mrf.mxu0
          %v508 = vadd.f32 0.0, %v507
          %v509 = vpop.f32.mrf.mxu0
          %v510 = vadd.f32 0.0, %v509
          %511 = vmatprep.mubr.bf16.mxu0 0
          %512 = vmatmul.mubr.bf16.gmra.mxu0 %v442
          %v513 = vpop.f32.mrf.mxu0
          %v514 = vadd.f32 0.0, %v513
          %v515 = vpop.f32.mrf.mxu0
          %v516 = vadd.f32 0.0, %v515
          %v517 = vpop.f32.mrf.mxu0
          %v518 = vadd.f32 0.0, %v517
          %v519 = vpop.f32.mrf.mxu0
          %v520 = vadd.f32 0.0, %v519
          %521 = vmatprep.mubr.bf16.mxu0 0
          %522 = vmatmul.mubr.bf16.gmra.mxu0 %v445
          %v523 = vpop.f32.mrf.mxu0
          %v524 = vadd.f32 0.0, %v523
          %v525 = vpop.f32.mrf.mxu0
          %v526 = vadd.f32 0.0, %v525
          %v527 = vpop.f32.mrf.mxu0
          %v528 = vadd.f32 0.0, %v527
          %v529 = vpop.f32.mrf.mxu0
          %v530 = vadd.f32 0.0, %v529
          %531 = vmatprep.mubr.bf16.mxu0 0
          %532 = vmatmul.mubr.bf16.gmra.mxu0 %v448
          %v533 = vpop.f32.mrf.mxu0
          %v534 = vadd.f32 0.0, %v533
          %v535 = vpop.f32.mrf.mxu0
          %v536 = vadd.f32 0.0, %v535
          %v537 = vpop.f32.mrf.mxu0
          %v538 = vadd.f32 0.0, %v537
          %v539 = vpop.f32.mrf.mxu0
          %v540 = vadd.f32 0.0, %v539
          %541 = vmatprep.mubr.bf16.mxu0 0
          %542 = vmatmul.mubr.bf16.gmra.mxu0 %v451
          %v543 = vpop.f32.mrf.mxu0
          %v544 = vadd.f32 0.0, %v543
          %v545 = vpop.f32.mrf.mxu0
          %v546 = vadd.f32 0.0, %v545
          %v547 = vpop.f32.mrf.mxu0
          %v548 = vadd.f32 0.0, %v547
          %v549 = vpop.f32.mrf.mxu0
          %v550 = vadd.f32 0.0, %v549
          %551 = vmatprep.mubr.bf16.mxu0 0
          %552 = vmatmul.mubr.bf16.gmra.mxu0 %v454
          %v553 = vpop.f32.mrf.mxu0
          %v554 = vadd.f32 0.0, %v553
          %v555 = vpop.f32.mrf.mxu0
          %v556 = vadd.f32 0.0, %v555
          %v557 = vpop.f32.mrf.mxu0
          %v558 = vadd.f32 0.0, %v557
          %v559 = vpop.f32.mrf.mxu0
          %v560 = vadd.f32 0.0, %v559
          %561 = vmatprep.mubr.bf16.mxu0 0
          %562 = vmatmul.mubr.bf16.gmra.mxu0 %v457
          %v563 = vpop.f32.mrf.mxu0
          %v564 = vadd.f32 0.0, %v563
          %v565 = vpop.f32.mrf.mxu0
          %v566 = vadd.f32 0.0, %v565
          %v567 = vpop.f32.mrf.mxu0
          %v568 = vadd.f32 0.0, %v567
          %v569 = vpop.f32.mrf.mxu0
          %v570 = vadd.f32 0.0, %v569
          %571 = vdwg.mxu0
          %v572 = vpack.c.bf16 %v498, %v494
          %v573 = vpack.c.bf16 %v500, %v496
          %v574 = vpack.c.bf16 %v508, %v504
          %v575 = vpack.c.bf16 %v510, %v506
          %v576 = vpack.c.bf16 %v518, %v514
          %v577 = vpack.c.bf16 %v520, %v516
          %v578 = vpack.c.bf16 %v528, %v524
          %v579 = vpack.c.bf16 %v530, %v526
          %v580 = vpack.c.bf16 %v538, %v534
          %v581 = vpack.c.bf16 %v540, %v536
          %v582 = vpack.c.bf16 %v548, %v544
          %v583 = vpack.c.bf16 %v550, %v546
          %v584 = vpack.c.bf16 %v558, %v554
          %v585 = vpack.c.bf16 %v560, %v556
          %v586 = vpack.c.bf16 %v568, %v564
          %v587 = vpack.c.bf16 %v570, %v566
          %v604 = vunpack.c.l.b16 %v572
          %v605 = vunpack.c.l.b16 %v573
          %v606 = vunpack.c.h.b16 %v572
          %v607 = vunpack.c.h.b16 %v573
          %v608 = vunpack.c.l.b16 %v574
          %v609 = vunpack.c.l.b16 %v575
          %v610 = vunpack.c.h.b16 %v574
          %v611 = vunpack.c.h.b16 %v575
          %v612 = vunpack.c.l.b16 %v576
          %v613 = vunpack.c.l.b16 %v577
          %v614 = vunpack.c.h.b16 %v576
          %v615 = vunpack.c.h.b16 %v577
          %v616 = vunpack.c.l.b16 %v578
          %v617 = vunpack.c.l.b16 %v579
          %v618 = vunpack.c.h.b16 %v578
          %v619 = vunpack.c.h.b16 %v579
          %v620 = vunpack.c.l.b16 %v580
          %v621 = vunpack.c.l.b16 %v581
          %v622 = vunpack.c.h.b16 %v580
          %v623 = vunpack.c.h.b16 %v581
          %v624 = vunpack.c.l.b16 %v582
          %v625 = vunpack.c.l.b16 %v583
          %v626 = vunpack.c.h.b16 %v582
          %v627 = vunpack.c.h.b16 %v583
          %v628 = vunpack.c.l.b16 %v584
          %v629 = vunpack.c.l.b16 %v585
          %v630 = vunpack.c.h.b16 %v584
          %v631 = vunpack.c.h.b16 %v585
          %v632 = vunpack.c.l.b16 %v586
          %v633 = vunpack.c.l.b16 %v587
          %v634 = vunpack.c.h.b16 %v586
          %v635 = vunpack.c.h.b16 %v587
          %v636 = vpack.c.b16 %v605, %v604
          %v637 = vpack.c.b16 %v607, %v606
          %v638 = vpack.c.b16 %v609, %v608
          %v639 = vpack.c.b16 %v611, %v610
          %v640 = vpack.c.b16 %v613, %v612
          %v641 = vpack.c.b16 %v615, %v614
          %v642 = vpack.c.b16 %v617, %v616
          %v643 = vpack.c.b16 %v619, %v618
          %v644 = vpack.c.b16 %v621, %v620
          %v645 = vpack.c.b16 %v623, %v622
          %v646 = vpack.c.b16 %v625, %v624
          %v647 = vpack.c.b16 %v627, %v626
          %v648 = vpack.c.b16 %v629, %v628
          %v649 = vpack.c.b16 %v631, %v630
          %v650 = vpack.c.b16 %v633, %v632
          %v651 = vpack.c.b16 %v635, %v634
          %668 = vst [vmem:[#allocation2] sm:$0xff] %v636
          %669 = vst [vmem:[#allocation2 + $0x8] sm:$0xff] %v637
          %670 = vst [vmem:[#allocation2 + $0x10] sm:$0xff] %v638
          %671 = vst [vmem:[#allocation2 + $0x18] sm:$0xff] %v639
          %672 = vst [vmem:[#allocation2 + $0x20] sm:$0xff] %v640
          %673 = vst [vmem:[#allocation2 + $0x28] sm:$0xff] %v641
          %674 = vst [vmem:[#allocation2 + $0x30] sm:$0xff] %v642
          %675 = vst [vmem:[#allocation2 + $0x38] sm:$0xff] %v643
          %676 = vst [vmem:[#allocation2 + $0x40] sm:$0xff] %v644
          %677 = vst [vmem:[#allocation2 + $0x48] sm:$0xff] %v645
          %678 = vst [vmem:[#allocation2 + $0x50] sm:$0xff] %v646
          %679 = vst [vmem:[#allocation2 + $0x58] sm:$0xff] %v647
          %680 = vst [vmem:[#allocation2 + $0x60] sm:$0xff] %v648
          %681 = vst [vmem:[#allocation2 + $0x68] sm:$0xff] %v649
          %682 = vst [vmem:[#allocation2 + $0x70] sm:$0xff] %v650
          %683 = vst [vmem:[#allocation2 + $0x78] sm:$0xff] %v651
          %684 = vst [vmem:[#allocation3] sm:$0xff] 0.0
          %685 = vst [vmem:[#allocation3 + $0x8] sm:$0xff] 0.0
          %686 = vst [vmem:[#allocation3 + $0x10] sm:$0xff] 0.0
          %687 = vst [vmem:[#allocation3 + $0x18] sm:$0xff] 0.0
          %688 = vst [vmem:[#allocation3 + $0x20] sm:$0xff] 0.0
          %689 = vst [vmem:[#allocation3 + $0x28] sm:$0xff] 0.0
          %690 = vst [vmem:[#allocation3 + $0x30] sm:$0xff] 0.0
          %691 = vst [vmem:[#allocation3 + $0x38] sm:$0xff] 0.0
          %692 = vst [vmem:[#allocation3 + $0x40] sm:$0xff] 0.0
          %693 = vst [vmem:[#allocation3 + $0x48] sm:$0xff] 0.0
          %694 = vst [vmem:[#allocation3 + $0x50] sm:$0xff] 0.0
          %695 = vst [vmem:[#allocation3 + $0x58] sm:$0xff] 0.0
          %696 = vst [vmem:[#allocation3 + $0x60] sm:$0xff] 0.0
          %697 = vst [vmem:[#allocation3 + $0x68] sm:$0xff] 0.0
          %698 = vst [vmem:[#allocation3 + $0x70] sm:$0xff] 0.0
          %699 = vst [vmem:[#allocation3 + $0x78] sm:$0xff] 0.0
          %700 = vst [vmem:[#allocation3 + $0x80] sm:$0xff] 0.0
          %701 = vst [vmem:[#allocation3 + $0x88] sm:$0xff] 0.0
          %702 = vst [vmem:[#allocation3 + $0x90] sm:$0xff] 0.0
          %703 = vst [vmem:[#allocation3 + $0x98] sm:$0xff] 0.0
          %704 = vst [vmem:[#allocation3 + $0xa0] sm:$0xff] 0.0
          %705 = vst [vmem:[#allocation3 + $0xa8] sm:$0xff] 0.0
          %706 = vst [vmem:[#allocation3 + $0xb0] sm:$0xff] 0.0
          %707 = vst [vmem:[#allocation3 + $0xb8] sm:$0xff] 0.0
          %708 = vst [vmem:[#allocation3 + $0xc0] sm:$0xff] 0.0
          %709 = vst [vmem:[#allocation3 + $0xc8] sm:$0xff] 0.0
          %710 = vst [vmem:[#allocation3 + $0xd0] sm:$0xff] 0.0
          %711 = vst [vmem:[#allocation3 + $0xd8] sm:$0xff] 0.0
          %712 = vst [vmem:[#allocation3 + $0xe0] sm:$0xff] 0.0
          %713 = vst [vmem:[#allocation3 + $0xe8] sm:$0xff] 0.0
          %714 = vst [vmem:[#allocation3 + $0xf0] sm:$0xff] 0.0
          %715 = vst [vmem:[#allocation3 + $0xf8] sm:$0xff] 0.0
        $region86: #{offset_attention.1} parent=77 // pred_fallthru
          _
        %v716 = vld [vmem:[%s312] sm:$0xff]
        %v717 = vld [vmem:[%s312 + $0x8] sm:$0xff]
        %v718 = vld [vmem:[%s312 + $0x10] sm:$0xff]
        %v719 = vld [vmem:[%s312 + $0x18] sm:$0xff]
        %v720 = vld [vmem:[%s312 + $0x20] sm:$0xff]
        %v721 = vld [vmem:[%s312 + $0x28] sm:$0xff]
        %v722 = vld [vmem:[%s312 + $0x30] sm:$0xff]
        %v723 = vld [vmem:[%s312 + $0x38] sm:$0xff]
        %v724 = vpack.c.bf16 %v717, %v716
        %v725 = vpack.c.bf16 %v719, %v718
        %v726 = vpack.c.bf16 %v721, %v720
        %v727 = vpack.c.bf16 %v723, %v722
        %v728 = vld [vmem:[%s2] sm:$0xf]
        %v729 = vld [vmem:[%s2 + $0x4] sm:$0xf]
        %v730 = vld [vmem:[%s2 + $0x8] sm:$0xf]
        %v731 = vld [vmem:[%s2 + $0xc] sm:$0xf]
        %v732 = vld [vmem:[%s2 + $0x10] sm:$0xf]
        %v733 = vld [vmem:[%s2 + $0x14] sm:$0xf]
        %v734 = vld [vmem:[%s2 + $0x18] sm:$0xf]
        %v735 = vld [vmem:[%s2 + $0x1c] sm:$0xf]
        %v736 = vld [vmem:[%s2 + $0x20] sm:$0xf]
        %v737 = vld [vmem:[%s2 + $0x24] sm:$0xf]
        %v738 = vld [vmem:[%s2 + $0x28] sm:$0xf]
        %v739 = vld [vmem:[%s2 + $0x2c] sm:$0xf]
        %v740 = vld [vmem:[%s2 + $0x30] sm:$0xf]
        %v741 = vld [vmem:[%s2 + $0x34] sm:$0xf]
        %v742 = vld [vmem:[%s2 + $0x38] sm:$0xf]
        %v743 = vld [vmem:[%s2 + $0x3c] sm:$0xf]
        %v744 = vld [vmem:[%s2 + $0x40] sm:$0xf]
        %v745 = vld [vmem:[%s2 + $0x44] sm:$0xf]
        %v746 = vld [vmem:[%s2 + $0x48] sm:$0xf]
        %v747 = vld [vmem:[%s2 + $0x4c] sm:$0xf]
        %v748 = vld [vmem:[%s2 + $0x50] sm:$0xf]
        %v749 = vld [vmem:[%s2 + $0x54] sm:$0xf]
        %v750 = vld [vmem:[%s2 + $0x58] sm:$0xf]
        %v751 = vld [vmem:[%s2 + $0x5c] sm:$0xf]
        %v752 = vld [vmem:[%s2 + $0x60] sm:$0xf]
        %v753 = vld [vmem:[%s2 + $0x64] sm:$0xf]
        %v754 = vld [vmem:[%s2 + $0x68] sm:$0xf]
        %v755 = vld [vmem:[%s2 + $0x6c] sm:$0xf]
        %v756 = vld [vmem:[%s2 + $0x70] sm:$0xf]
        %v757 = vld [vmem:[%s2 + $0x74] sm:$0xf]
        %v758 = vld [vmem:[%s2 + $0x78] sm:$0xf]
        %v759 = vld [vmem:[%s2 + $0x7c] sm:$0xf]
        %v760 = vld [vmem:[%s3] sm:$0xff]
        %v761 = vld [vmem:[%s3 + $0x8] sm:$0xff]
        %v762 = vld [vmem:[%s3 + $0x10] sm:$0xff]
        %v763 = vld [vmem:[%s3 + $0x18] sm:$0xff]
        %v764 = vld [vmem:[%s3 + $0x20] sm:$0xff]
        %v765 = vld [vmem:[%s3 + $0x28] sm:$0xff]
        %v766 = vld [vmem:[%s3 + $0x30] sm:$0xff]
        %v767 = vld [vmem:[%s3 + $0x38] sm:$0xff]
        %v768 = vld [vmem:[%s3 + $0x40] sm:$0xff]
        %v769 = vld [vmem:[%s3 + $0x48] sm:$0xff]
        %v770 = vld [vmem:[%s3 + $0x50] sm:$0xff]
        %v771 = vld [vmem:[%s3 + $0x58] sm:$0xff]
        %v772 = vld [vmem:[%s3 + $0x60] sm:$0xff]
        %v773 = vld [vmem:[%s3 + $0x68] sm:$0xff]
        %v774 = vld [vmem:[%s3 + $0x70] sm:$0xff]
        %v775 = vld [vmem:[%s3 + $0x78] sm:$0xff]
        %v776 = vld [vmem:[%s3 + $0x80] sm:$0xff]
        %v777 = vld [vmem:[%s3 + $0x88] sm:$0xff]
        %v778 = vld [vmem:[%s3 + $0x90] sm:$0xff]
        %v779 = vld [vmem:[%s3 + $0x98] sm:$0xff]
        %v780 = vld [vmem:[%s3 + $0xa0] sm:$0xff]
        %v781 = vld [vmem:[%s3 + $0xa8] sm:$0xff]
        %v782 = vld [vmem:[%s3 + $0xb0] sm:$0xff]
        %v783 = vld [vmem:[%s3 + $0xb8] sm:$0xff]
        %v784 = vld [vmem:[%s3 + $0xc0] sm:$0xff]
        %v785 = vld [vmem:[%s3 + $0xc8] sm:$0xff]
        %v786 = vld [vmem:[%s3 + $0xd0] sm:$0xff]
        %v787 = vld [vmem:[%s3 + $0xd8] sm:$0xff]
        %v788 = vld [vmem:[%s3 + $0xe0] sm:$0xff]
        %v789 = vld [vmem:[%s3 + $0xe8] sm:$0xff]
        %v790 = vld [vmem:[%s3 + $0xf0] sm:$0xff]
        %v791 = vld [vmem:[%s3 + $0xf8] sm:$0xff]
        %793 = vset.pattern.permute.xlu0 0
        %794 = vperm.xlu0 %793, %v760
        %v795 = vpop.permute.xlu0 %794
        %798 = vset.pattern.permute.xlu0 0
        %799 = vperm.xlu0 %798, %v761
        %v800 = vpop.permute.xlu0 %799
        %803 = vset.pattern.permute.xlu0 0
        %804 = vperm.xlu0 %803, %v762
        %v805 = vpop.permute.xlu0 %804
        %808 = vset.pattern.permute.xlu0 0
        %809 = vperm.xlu0 %808, %v763
        %v810 = vpop.permute.xlu0 %809
        %813 = vset.pattern.permute.xlu0 0
        %814 = vperm.xlu0 %813, %v764
        %v815 = vpop.permute.xlu0 %814
        %818 = vset.pattern.permute.xlu0 0
        %819 = vperm.xlu0 %818, %v765
        %v820 = vpop.permute.xlu0 %819
        %823 = vset.pattern.permute.xlu0 0
        %824 = vperm.xlu0 %823, %v766
        %v825 = vpop.permute.xlu0 %824
        %828 = vset.pattern.permute.xlu0 0
        %829 = vperm.xlu0 %828, %v767
        %v830 = vpop.permute.xlu0 %829
        %833 = vset.pattern.permute.xlu0 0
        %834 = vperm.xlu0 %833, %v768
        %v835 = vpop.permute.xlu0 %834
        %838 = vset.pattern.permute.xlu0 0
        %839 = vperm.xlu0 %838, %v769
        %v840 = vpop.permute.xlu0 %839
        %843 = vset.pattern.permute.xlu0 0
        %844 = vperm.xlu0 %843, %v770
        %v845 = vpop.permute.xlu0 %844
        %848 = vset.pattern.permute.xlu0 0
        %849 = vperm.xlu0 %848, %v771
        %v850 = vpop.permute.xlu0 %849
        %853 = vset.pattern.permute.xlu0 0
        %854 = vperm.xlu0 %853, %v772
        %v855 = vpop.permute.xlu0 %854
        %858 = vset.pattern.permute.xlu0 0
        %859 = vperm.xlu0 %858, %v773
        %v860 = vpop.permute.xlu0 %859
        %863 = vset.pattern.permute.xlu0 0
        %864 = vperm.xlu0 %863, %v774
        %v865 = vpop.permute.xlu0 %864
        %868 = vset.pattern.permute.xlu0 0
        %869 = vperm.xlu0 %868, %v775
        %v870 = vpop.permute.xlu0 %869
        %873 = vset.pattern.permute.xlu0 0
        %874 = vperm.xlu0 %873, %v776
        %v875 = vpop.permute.xlu0 %874
        %878 = vset.pattern.permute.xlu0 0
        %879 = vperm.xlu0 %878, %v777
        %v880 = vpop.permute.xlu0 %879
        %883 = vset.pattern.permute.xlu0 0
        %884 = vperm.xlu0 %883, %v778
        %v885 = vpop.permute.xlu0 %884
        %888 = vset.pattern.permute.xlu0 0
        %889 = vperm.xlu0 %888, %v779
        %v890 = vpop.permute.xlu0 %889
        %893 = vset.pattern.permute.xlu0 0
        %894 = vperm.xlu0 %893, %v780
        %v895 = vpop.permute.xlu0 %894
        %898 = vset.pattern.permute.xlu0 0
        %899 = vperm.xlu0 %898, %v781
        %v900 = vpop.permute.xlu0 %899
        %903 = vset.pattern.permute.xlu0 0
        %904 = vperm.xlu0 %903, %v782
        %v905 = vpop.permute.xlu0 %904
        %908 = vset.pattern.permute.xlu0 0
        %909 = vperm.xlu0 %908, %v783
        %v910 = vpop.permute.xlu0 %909
        %913 = vset.pattern.permute.xlu0 0
        %914 = vperm.xlu0 %913, %v784
        %v915 = vpop.permute.xlu0 %914
        %918 = vset.pattern.permute.xlu0 0
        %919 = vperm.xlu0 %918, %v785
        %v920 = vpop.permute.xlu0 %919
        %923 = vset.pattern.permute.xlu0 0
        %924 = vperm.xlu0 %923, %v786
        %v925 = vpop.permute.xlu0 %924
        %928 = vset.pattern.permute.xlu0 0
        %929 = vperm.xlu0 %928, %v787
        %v930 = vpop.permute.xlu0 %929
        %933 = vset.pattern.permute.xlu0 0
        %934 = vperm.xlu0 %933, %v788
        %v935 = vpop.permute.xlu0 %934
        %938 = vset.pattern.permute.xlu0 0
        %939 = vperm.xlu0 %938, %v789
        %v940 = vpop.permute.xlu0 %939
        %943 = vset.pattern.permute.xlu0 0
        %944 = vperm.xlu0 %943, %v790
        %v945 = vpop.permute.xlu0 %944
        %948 = vset.pattern.permute.xlu0 0
        %949 = vperm.xlu0 %948, %v791
        %v950 = vpop.permute.xlu0 %949
        %v984 = vunpack.c.l.b16 %v728
        %v985 = vunpack.c.l.b16 %v729
        %v986 = vunpack.c.l.b16 %v730
        %v987 = vunpack.c.l.b16 %v731
        %v988 = vunpack.c.l.b16 %v732
        %v989 = vunpack.c.l.b16 %v733
        %v990 = vunpack.c.l.b16 %v734
        %v991 = vunpack.c.l.b16 %v735
        %v992 = vunpack.c.l.b16 %v736
        %v993 = vunpack.c.l.b16 %v737
        %v994 = vunpack.c.l.b16 %v738
        %v995 = vunpack.c.l.b16 %v739
        %v996 = vunpack.c.l.b16 %v740
        %v997 = vunpack.c.l.b16 %v741
        %v998 = vunpack.c.l.b16 %v742
        %v999 = vunpack.c.l.b16 %v743
        %v1000 = vunpack.c.l.b16 %v744
        %v1001 = vunpack.c.l.b16 %v745
        %v1002 = vunpack.c.l.b16 %v746
        %v1003 = vunpack.c.l.b16 %v747
        %v1004 = vunpack.c.l.b16 %v748
        %v1005 = vunpack.c.l.b16 %v749
        %v1006 = vunpack.c.l.b16 %v750
        %v1007 = vunpack.c.l.b16 %v751
        %v1008 = vunpack.c.l.b16 %v752
        %v1009 = vunpack.c.l.b16 %v753
        %v1010 = vunpack.c.l.b16 %v754
        %v1011 = vunpack.c.l.b16 %v755
        %v1012 = vunpack.c.l.b16 %v756
        %v1013 = vunpack.c.l.b16 %v757
        %v1014 = vunpack.c.l.b16 %v758
        %v1015 = vunpack.c.l.b16 %v759
        %v1016 = vpack.c.b16 %v985, %v984
        %v1017 = vpack.c.b16 %v987, %v986
        %v1018 = vpack.c.b16 %v989, %v988
        %v1019 = vpack.c.b16 %v991, %v990
        %v1020 = vpack.c.b16 %v993, %v992
        %v1021 = vpack.c.b16 %v995, %v994
        %v1022 = vpack.c.b16 %v997, %v996
        %v1023 = vpack.c.b16 %v999, %v998
        %v1024 = vpack.c.b16 %v1001, %v1000
        %v1025 = vpack.c.b16 %v1003, %v1002
        %v1026 = vpack.c.b16 %v1005, %v1004
        %v1027 = vpack.c.b16 %v1007, %v1006
        %v1028 = vpack.c.b16 %v1009, %v1008
        %v1029 = vpack.c.b16 %v1011, %v1010
        %v1030 = vpack.c.b16 %v1013, %v1012
        %v1031 = vpack.c.b16 %v1015, %v1014
        %vm1032 = vcmask 523264
        %v1034 = vsel %vm1032, %v1016, 0
        %v1037 = vsel %vm1032, %v1017, 0
        %v1040 = vsel %vm1032, %v1018, 0
        %v1043 = vsel %vm1032, %v1019, 0
        %v1046 = vsel %vm1032, %v1020, 0
        %v1049 = vsel %vm1032, %v1021, 0
        %v1052 = vsel %vm1032, %v1022, 0
        %v1055 = vsel %vm1032, %v1023, 0
        %v1058 = vsel %vm1032, %v1024, 0
        %v1061 = vsel %vm1032, %v1025, 0
        %v1064 = vsel %vm1032, %v1026, 0
        %v1067 = vsel %vm1032, %v1027, 0
        %v1070 = vsel %vm1032, %v1028, 0
        %v1073 = vsel %vm1032, %v1029, 0
        %v1076 = vsel %vm1032, %v1030, 0
        %v1079 = vsel %vm1032, %v1031, 0
        %1081 = vmatprep.subr.bf16.mxu0 0
        %1082 = vmatpush1.bf16.msra.mxu0 0
        %1083 = vmatprep.subr.bf16.mxu0 0
        %1084 = vmatpush1.bf16.msra.mxu0 0
        %1085 = vmatprep.subr.bf16.mxu0 0
        %1086 = vmatpush1.bf16.msra.mxu0 0
        %1087 = vmatprep.subr.bf16.mxu0 0
        %1088 = vmatpush1.bf16.msra.mxu0 0
        %1089 = vmatprep.subr.bf16.mxu0 0
        %1090 = vmatpush1.bf16.msra.mxu0 %v727
        %1091 = vmatprep.subr.bf16.mxu0 0
        %1092 = vmatpush1.bf16.msra.mxu0 %v726
        %1093 = vmatprep.subr.bf16.mxu0 0
        %1094 = vmatpush1.bf16.msra.mxu0 %v725
        %1095 = vmatprep.subr.bf16.mxu0 0
        %1096 = vmatpush1.bf16.msra.mxu0 %v724
        %1097 = vmatprep.subr.bf16.mxu0 0
        %1098 = vmatpush2.bf16.msra.mxu0 0
        %1099 = vmatprep.subr.bf16.mxu0 0
        %1100 = vmatpush2.bf16.msra.mxu0 0
        %1101 = vmatprep.subr.bf16.mxu0 0
        %1102 = vmatpush2.bf16.msra.mxu0 0
        %1103 = vmatprep.subr.bf16.mxu0 0
        %1104 = vmatpush2.bf16.msra.mxu0 0
        %1105 = vmatprep.subr.bf16.mxu0 0
        %1106 = vmatpush2.bf16.msra.mxu0 0
        %1107 = vmatprep.subr.bf16.mxu0 0
        %1108 = vmatpush2.bf16.msra.mxu0 0
        %1109 = vmatprep.subr.bf16.mxu0 0
        %1110 = vmatpush2.bf16.msra.mxu0 0
        %1111 = vmatprep.subr.bf16.mxu0 0
        %1112 = vmatpush2.bf16.msra.mxu0 0
        %1113 = vmatprep.mubr.bf16.mxu0 0
        %1114 = vmatmul.mubr.bf16.gmra.mxu0 %v1034
        %v1115 = vpop.f32.mrf.mxu0
        %v1116 = vadd.f32 %v795, %v1115
        %v1117 = vpop.f32.mrf.mxu0
        %v1118 = vpop.f32.mrf.mxu0
        %v1119 = vadd.f32 %v800, %v1118
        %v1120 = vpop.f32.mrf.mxu0
        %1121 = vmatprep.mubr.bf16.mxu0 0
        %1122 = vmatmul.mubr.bf16.gmra.mxu0 %v1037
        %v1123 = vpop.f32.mrf.mxu0
        %v1124 = vadd.f32 %v805, %v1123
        %v1125 = vpop.f32.mrf.mxu0
        %v1126 = vpop.f32.mrf.mxu0
        %v1127 = vadd.f32 %v810, %v1126
        %v1128 = vpop.f32.mrf.mxu0
        %1129 = vmatprep.mubr.bf16.mxu0 0
        %1130 = vmatmul.mubr.bf16.gmra.mxu0 %v1040
        %v1131 = vpop.f32.mrf.mxu0
        %v1132 = vadd.f32 %v815, %v1131
        %v1133 = vpop.f32.mrf.mxu0
        %v1134 = vpop.f32.mrf.mxu0
        %v1135 = vadd.f32 %v820, %v1134
        %v1136 = vpop.f32.mrf.mxu0
        %1137 = vmatprep.mubr.bf16.mxu0 0
        %1138 = vmatmul.mubr.bf16.gmra.mxu0 %v1043
        %v1139 = vpop.f32.mrf.mxu0
        %v1140 = vadd.f32 %v825, %v1139
        %v1141 = vpop.f32.mrf.mxu0
        %v1142 = vpop.f32.mrf.mxu0
        %v1143 = vadd.f32 %v830, %v1142
        %v1144 = vpop.f32.mrf.mxu0
        %1145 = vmatprep.mubr.bf16.mxu0 0
        %1146 = vmatmul.mubr.bf16.gmra.mxu0 %v1046
        %v1147 = vpop.f32.mrf.mxu0
        %v1148 = vadd.f32 %v835, %v1147
        %v1149 = vpop.f32.mrf.mxu0
        %v1150 = vpop.f32.mrf.mxu0
        %v1151 = vadd.f32 %v840, %v1150
        %v1152 = vpop.f32.mrf.mxu0
        %1153 = vmatprep.mubr.bf16.mxu0 0
        %1154 = vmatmul.mubr.bf16.gmra.mxu0 %v1049
        %v1155 = vpop.f32.mrf.mxu0
        %v1156 = vadd.f32 %v845, %v1155
        %v1157 = vpop.f32.mrf.mxu0
        %v1158 = vpop.f32.mrf.mxu0
        %v1159 = vadd.f32 %v850, %v1158
        %v1160 = vpop.f32.mrf.mxu0
        %1161 = vmatprep.mubr.bf16.mxu0 0
        %1162 = vmatmul.mubr.bf16.gmra.mxu0 %v1052
        %v1163 = vpop.f32.mrf.mxu0
        %v1164 = vadd.f32 %v855, %v1163
        %v1165 = vpop.f32.mrf.mxu0
        %v1166 = vpop.f32.mrf.mxu0
        %v1167 = vadd.f32 %v860, %v1166
        %v1168 = vpop.f32.mrf.mxu0
        %1169 = vmatprep.mubr.bf16.mxu0 0
        %1170 = vmatmul.mubr.bf16.gmra.mxu0 %v1055
        %v1171 = vpop.f32.mrf.mxu0
        %v1172 = vadd.f32 %v865, %v1171
        %v1173 = vpop.f32.mrf.mxu0
        %v1174 = vpop.f32.mrf.mxu0
        %v1175 = vadd.f32 %v870, %v1174
        %v1176 = vpop.f32.mrf.mxu0
        %1177 = vmatprep.mubr.bf16.mxu0 0
        %1178 = vmatmul.mubr.bf16.gmra.mxu0 %v1058
        %v1179 = vpop.f32.mrf.mxu0
        %v1180 = vadd.f32 %v875, %v1179
        %v1181 = vpop.f32.mrf.mxu0
        %v1182 = vpop.f32.mrf.mxu0
        %v1183 = vadd.f32 %v880, %v1182
        %v1184 = vpop.f32.mrf.mxu0
        %1185 = vmatprep.mubr.bf16.mxu0 0
        %1186 = vmatmul.mubr.bf16.gmra.mxu0 %v1061
        %v1187 = vpop.f32.mrf.mxu0
        %v1188 = vadd.f32 %v885, %v1187
        %v1189 = vpop.f32.mrf.mxu0
        %v1190 = vpop.f32.mrf.mxu0
        %v1191 = vadd.f32 %v890, %v1190
        %v1192 = vpop.f32.mrf.mxu0
        %1193 = vmatprep.mubr.bf16.mxu0 0
        %1194 = vmatmul.mubr.bf16.gmra.mxu0 %v1064
        %v1195 = vpop.f32.mrf.mxu0
        %v1196 = vadd.f32 %v895, %v1195
        %v1197 = vpop.f32.mrf.mxu0
        %v1198 = vpop.f32.mrf.mxu0
        %v1199 = vadd.f32 %v900, %v1198
        %v1200 = vpop.f32.mrf.mxu0
        %1201 = vmatprep.mubr.bf16.mxu0 0
        %1202 = vmatmul.mubr.bf16.gmra.mxu0 %v1067
        %v1203 = vpop.f32.mrf.mxu0
        %v1204 = vadd.f32 %v905, %v1203
        %v1205 = vpop.f32.mrf.mxu0
        %v1206 = vpop.f32.mrf.mxu0
        %v1207 = vadd.f32 %v910, %v1206
        %v1208 = vpop.f32.mrf.mxu0
        %1209 = vmatprep.mubr.bf16.mxu0 0
        %1210 = vmatmul.mubr.bf16.gmra.mxu0 %v1070
        %v1211 = vpop.f32.mrf.mxu0
        %v1212 = vadd.f32 %v915, %v1211
        %v1213 = vpop.f32.mrf.mxu0
        %v1214 = vpop.f32.mrf.mxu0
        %v1215 = vadd.f32 %v920, %v1214
        %v1216 = vpop.f32.mrf.mxu0
        %1217 = vmatprep.mubr.bf16.mxu0 0
        %1218 = vmatmul.mubr.bf16.gmra.mxu0 %v1073
        %v1219 = vpop.f32.mrf.mxu0
        %v1220 = vadd.f32 %v925, %v1219
        %v1221 = vpop.f32.mrf.mxu0
        %v1222 = vpop.f32.mrf.mxu0
        %v1223 = vadd.f32 %v930, %v1222
        %v1224 = vpop.f32.mrf.mxu0
        %1225 = vmatprep.mubr.bf16.mxu0 0
        %1226 = vmatmul.mubr.bf16.gmra.mxu0 %v1076
        %v1227 = vpop.f32.mrf.mxu0
        %v1228 = vadd.f32 %v935, %v1227
        %v1229 = vpop.f32.mrf.mxu0
        %v1230 = vpop.f32.mrf.mxu0
        %v1231 = vadd.f32 %v940, %v1230
        %v1232 = vpop.f32.mrf.mxu0
        %1233 = vmatprep.mubr.bf16.mxu0 0
        %1234 = vmatmul.mubr.bf16.gmra.mxu0 %v1079
        %v1235 = vpop.f32.mrf.mxu0
        %v1236 = vadd.f32 %v945, %v1235
        %v1237 = vpop.f32.mrf.mxu0
        %v1238 = vpop.f32.mrf.mxu0
        %v1239 = vadd.f32 %v950, %v1238
        %v1240 = vpop.f32.mrf.mxu0
        %1241 = vdwg.mxu0
        %v1242 = vpack.c.bf16 %v1119, %v1116
        %v1243 = vpack.c.bf16 %v1127, %v1124
        %v1244 = vpack.c.bf16 %v1135, %v1132
        %v1245 = vpack.c.bf16 %v1143, %v1140
        %v1246 = vpack.c.bf16 %v1151, %v1148
        %v1247 = vpack.c.bf16 %v1159, %v1156
        %v1248 = vpack.c.bf16 %v1167, %v1164
        %v1249 = vpack.c.bf16 %v1175, %v1172
        %v1250 = vpack.c.bf16 %v1183, %v1180
        %v1251 = vpack.c.bf16 %v1191, %v1188
        %v1252 = vpack.c.bf16 %v1199, %v1196
        %v1253 = vpack.c.bf16 %v1207, %v1204
        %v1254 = vpack.c.bf16 %v1215, %v1212
        %v1255 = vpack.c.bf16 %v1223, %v1220
        %v1256 = vpack.c.bf16 %v1231, %v1228
        %v1257 = vpack.c.bf16 %v1239, %v1236
        %v1258 = vld [vmem:[#allocation2] sm:$0xff]
        %v1259 = vld [vmem:[#allocation2 + $0x8] sm:$0xff]
        %v1260 = vld [vmem:[#allocation2 + $0x10] sm:$0xff]
        %v1261 = vld [vmem:[#allocation2 + $0x18] sm:$0xff]
        %v1262 = vld [vmem:[#allocation2 + $0x20] sm:$0xff]
        %v1263 = vld [vmem:[#allocation2 + $0x28] sm:$0xff]
        %v1264 = vld [vmem:[#allocation2 + $0x30] sm:$0xff]
        %v1265 = vld [vmem:[#allocation2 + $0x38] sm:$0xff]
        %v1266 = vld [vmem:[#allocation2 + $0x40] sm:$0xff]
        %v1267 = vld [vmem:[#allocation2 + $0x48] sm:$0xff]
        %v1268 = vld [vmem:[#allocation2 + $0x50] sm:$0xff]
        %v1269 = vld [vmem:[#allocation2 + $0x58] sm:$0xff]
        %v1270 = vld [vmem:[#allocation2 + $0x60] sm:$0xff]
        %v1271 = vld [vmem:[#allocation2 + $0x68] sm:$0xff]
        %v1272 = vld [vmem:[#allocation2 + $0x70] sm:$0xff]
        %v1273 = vld [vmem:[#allocation2 + $0x78] sm:$0xff]
        %1274 = vxpose.xlu0.c.b16.start [1/8] %v1242, 128
        %1275 = vxpose.xlu0.c.b16.cont [2/8] %v1243, 128
        %1276 = vxpose.xlu0.c.b16.cont [3/8] %v1244, 128
        %1277 = vxpose.xlu0.c.b16.cont [4/8] %v1245, 128
        %1278 = vxpose.xlu0.c.b16.cont [5/8] %v1246, 128
        %1279 = vxpose.xlu0.c.b16.cont [6/8] %v1247, 128
        %1280 = vxpose.xlu0.c.b16.cont [7/8] %v1248, 128
        %1281 = vxpose.xlu0.c.b16.end [8/8] %v1249, 128
        %v1282 = vpop.trf.xlu0
        %v1283 = vpop.trf.xlu0
        %v1284 = vpop.trf.xlu0
        %v1285 = vpop.trf.xlu0
        %v1286 = vpop.trf.xlu0
        %v1287 = vpop.trf.xlu0
        %v1288 = vpop.trf.xlu0
        %v1289 = vpop.trf.xlu0
        %v1306 = vunpack.c.l.b16 %v1258
        %v1307 = vunpack.c.h.b16 %v1258
        %v1308 = vunpack.c.l.b16 %v1259
        %v1309 = vunpack.c.h.b16 %v1259
        %v1310 = vunpack.c.l.b16 %v1260
        %v1311 = vunpack.c.h.b16 %v1260
        %v1312 = vunpack.c.l.b16 %v1261
        %v1313 = vunpack.c.h.b16 %v1261
        %v1314 = vunpack.c.l.b16 %v1262
        %v1315 = vunpack.c.h.b16 %v1262
        %v1316 = vunpack.c.l.b16 %v1263
        %v1317 = vunpack.c.h.b16 %v1263
        %v1318 = vunpack.c.l.b16 %v1264
        %v1319 = vunpack.c.h.b16 %v1264
        %v1320 = vunpack.c.l.b16 %v1265
        %v1321 = vunpack.c.h.b16 %v1265
        %v1322 = vunpack.c.l.b16 %v1266
        %v1323 = vunpack.c.h.b16 %v1266
        %v1324 = vunpack.c.l.b16 %v1267
        %v1325 = vunpack.c.h.b16 %v1267
        %v1326 = vunpack.c.l.b16 %v1268
        %v1327 = vunpack.c.h.b16 %v1268
        %v1328 = vunpack.c.l.b16 %v1269
        %v1329 = vunpack.c.h.b16 %v1269
        %v1330 = vunpack.c.l.b16 %v1270
        %v1331 = vunpack.c.h.b16 %v1270
        %v1332 = vunpack.c.l.b16 %v1271
        %v1333 = vunpack.c.h.b16 %v1271
        %v1334 = vunpack.c.l.b16 %v1272
        %v1335 = vunpack.c.h.b16 %v1272
        %v1336 = vunpack.c.l.b16 %v1273
        %v1337 = vunpack.c.h.b16 %v1273
        %v1338 = vpack.c.b16 %v1308, %v1306
        %v1339 = vpack.c.b16 %v1309, %v1307
        %v1340 = vpack.c.b16 %v1312, %v1310
        %v1341 = vpack.c.b16 %v1313, %v1311
        %v1342 = vpack.c.b16 %v1316, %v1314
        %v1343 = vpack.c.b16 %v1317, %v1315
        %v1344 = vpack.c.b16 %v1320, %v1318
        %v1345 = vpack.c.b16 %v1321, %v1319
        %v1346 = vpack.c.b16 %v1324, %v1322
        %v1347 = vpack.c.b16 %v1325, %v1323
        %v1348 = vpack.c.b16 %v1328, %v1326
        %v1349 = vpack.c.b16 %v1329, %v1327
        %v1350 = vpack.c.b16 %v1332, %v1330
        %v1351 = vpack.c.b16 %v1333, %v1331
        %v1352 = vpack.c.b16 %v1336, %v1334
        %v1353 = vpack.c.b16 %v1337, %v1335
        %1370 = vmatprep.subr.bf16.mxu0 %v1353
        %1371 = vmatpush1.bf16.msra.mxu0 %v1352
        %1372 = vmatprep.subr.bf16.mxu0 %v1351
        %1373 = vmatpush1.bf16.msra.mxu0 %v1350
        %1374 = vmatprep.subr.bf16.mxu0 %v1349
        %1375 = vmatpush1.bf16.msra.mxu0 %v1348
        %1376 = vmatprep.subr.bf16.mxu0 %v1347
        %1377 = vmatpush1.bf16.msra.mxu0 %v1346
        %1378 = vmatprep.subr.bf16.mxu0 %v1345
        %1379 = vmatpush1.bf16.msra.mxu0 %v1344
        %1380 = vmatprep.subr.bf16.mxu0 %v1343
        %1381 = vmatpush1.bf16.msra.mxu0 %v1342
        %1382 = vmatprep.subr.bf16.mxu0 %v1341
        %1383 = vmatpush1.bf16.msra.mxu0 %v1340
        %1384 = vmatprep.subr.bf16.mxu0 %v1339
        %1385 = vmatpush1.bf16.msra.mxu0 %v1338
        %1386 = vmatprep.subr.bf16.mxu0 0
        %1387 = vmatpush2.bf16.msra.mxu0 0
        %1388 = vmatprep.subr.bf16.mxu0 0
        %1389 = vmatpush2.bf16.msra.mxu0 0
        %1390 = vmatprep.subr.bf16.mxu0 0
        %1391 = vmatpush2.bf16.msra.mxu0 0
        %1392 = vmatprep.subr.bf16.mxu0 0
        %1393 = vmatpush2.bf16.msra.mxu0 0
        %1394 = vmatprep.subr.bf16.mxu0 0
        %1395 = vmatpush2.bf16.msra.mxu0 0
        %1396 = vmatprep.subr.bf16.mxu0 0
        %1397 = vmatpush2.bf16.msra.mxu0 0
        %1398 = vmatprep.subr.bf16.mxu0 0
        %1399 = vmatpush2.bf16.msra.mxu0 0
        %1400 = vmatprep.subr.bf16.mxu0 0
        %1401 = vmatpush2.bf16.msra.mxu0 0
        %1402 = vmatprep.mubr.bf16.mxu0 0
        %1403 = vmatmul.mubr.bf16.gmra.mxu0 %v1282
        %v1404 = vpop.f32.mrf.mxu0
        %v1405 = vadd.f32 0.0, %v1404
        %v1406 = vpop.f32.mrf.mxu0
        %v1407 = vadd.f32 0.0, %v1406
        %v1408 = vpop.f32.mrf.mxu0
        %v1409 = vadd.f32 0.0, %v1408
        %v1410 = vpop.f32.mrf.mxu0
        %v1411 = vadd.f32 0.0, %v1410
        %1412 = vmatprep.mubr.bf16.mxu0 0
        %1413 = vmatmul.mubr.bf16.gmra.mxu0 %v1283
        %v1414 = vpop.f32.mrf.mxu0
        %v1415 = vadd.f32 0.0, %v1414
        %v1416 = vpop.f32.mrf.mxu0
        %v1417 = vadd.f32 0.0, %v1416
        %v1418 = vpop.f32.mrf.mxu0
        %v1419 = vadd.f32 0.0, %v1418
        %v1420 = vpop.f32.mrf.mxu0
        %v1421 = vadd.f32 0.0, %v1420
        %1422 = vmatprep.mubr.bf16.mxu0 0
        %1423 = vmatmul.mubr.bf16.gmra.mxu0 %v1284
        %v1424 = vpop.f32.mrf.mxu0
        %v1425 = vadd.f32 0.0, %v1424
        %v1426 = vpop.f32.mrf.mxu0
        %v1427 = vadd.f32 0.0, %v1426
        %v1428 = vpop.f32.mrf.mxu0
        %v1429 = vadd.f32 0.0, %v1428
        %v1430 = vpop.f32.mrf.mxu0
        %v1431 = vadd.f32 0.0, %v1430
        %1432 = vmatprep.mubr.bf16.mxu0 0
        %1433 = vmatmul.mubr.bf16.gmra.mxu0 %v1285
        %v1434 = vpop.f32.mrf.mxu0
        %v1435 = vadd.f32 0.0, %v1434
        %v1436 = vpop.f32.mrf.mxu0
        %v1437 = vadd.f32 0.0, %v1436
        %v1438 = vpop.f32.mrf.mxu0
        %v1439 = vadd.f32 0.0, %v1438
        %v1440 = vpop.f32.mrf.mxu0
        %v1441 = vadd.f32 0.0, %v1440
        %1442 = vmatprep.mubr.bf16.mxu0 0
        %1443 = vmatmul.mubr.bf16.gmra.mxu0 %v1286
        %v1444 = vpop.f32.mrf.mxu0
        %v1445 = vadd.f32 0.0, %v1444
        %v1446 = vpop.f32.mrf.mxu0
        %v1447 = vadd.f32 0.0, %v1446
        %v1448 = vpop.f32.mrf.mxu0
        %v1449 = vadd.f32 0.0, %v1448
        %v1450 = vpop.f32.mrf.mxu0
        %v1451 = vadd.f32 0.0, %v1450
        %1452 = vmatprep.mubr.bf16.mxu0 0
        %1453 = vmatmul.mubr.bf16.gmra.mxu0 %v1287
        %v1454 = vpop.f32.mrf.mxu0
        %v1455 = vadd.f32 0.0, %v1454
        %v1456 = vpop.f32.mrf.mxu0
        %v1457 = vadd.f32 0.0, %v1456
        %v1458 = vpop.f32.mrf.mxu0
        %v1459 = vadd.f32 0.0, %v1458
        %v1460 = vpop.f32.mrf.mxu0
        %v1461 = vadd.f32 0.0, %v1460
        %1462 = vmatprep.mubr.bf16.mxu0 0
        %1463 = vmatmul.mubr.bf16.gmra.mxu0 %v1288
        %v1464 = vpop.f32.mrf.mxu0
        %v1465 = vadd.f32 0.0, %v1464
        %v1466 = vpop.f32.mrf.mxu0
        %v1467 = vadd.f32 0.0, %v1466
        %v1468 = vpop.f32.mrf.mxu0
        %v1469 = vadd.f32 0.0, %v1468
        %v1470 = vpop.f32.mrf.mxu0
        %v1471 = vadd.f32 0.0, %v1470
        %1472 = vmatprep.mubr.bf16.mxu0 0
        %1473 = vmatmul.mubr.bf16.gmra.mxu0 %v1289
        %v1474 = vpop.f32.mrf.mxu0
        %v1475 = vadd.f32 0.0, %v1474
        %v1476 = vpop.f32.mrf.mxu0
        %v1477 = vadd.f32 0.0, %v1476
        %v1478 = vpop.f32.mrf.mxu0
        %v1479 = vadd.f32 0.0, %v1478
        %v1480 = vpop.f32.mrf.mxu0
        %v1481 = vadd.f32 0.0, %v1480
        %1482 = vdwg.mxu0
        %v1483 = vmax.f32 %v1405, %v1407
        %1484 = vmax.xlane.f32.xlu0 %v1483
        %v1485 = vpop.xlane.xlu0 %1484
        %v1486 = vmax.f32 %v1409, %v1411
        %1487 = vmax.xlane.f32.xlu0 %v1486
        %v1488 = vpop.xlane.xlu0 %1487
        %v1489 = vmax.f32 %v1415, %v1417
        %1490 = vmax.xlane.f32.xlu0 %v1489
        %v1491 = vpop.xlane.xlu0 %1490
        %v1492 = vmax.f32 %v1419, %v1421
        %1493 = vmax.xlane.f32.xlu0 %v1492
        %v1494 = vpop.xlane.xlu0 %1493
        %v1495 = vmax.f32 %v1425, %v1427
        %1496 = vmax.xlane.f32.xlu0 %v1495
        %v1497 = vpop.xlane.xlu0 %1496
        %v1498 = vmax.f32 %v1429, %v1431
        %1499 = vmax.xlane.f32.xlu0 %v1498
        %v1500 = vpop.xlane.xlu0 %1499
        %v1501 = vmax.f32 %v1435, %v1437
        %1502 = vmax.xlane.f32.xlu0 %v1501
        %v1503 = vpop.xlane.xlu0 %1502
        %v1504 = vmax.f32 %v1439, %v1441
        %1505 = vmax.xlane.f32.xlu0 %v1504
        %v1506 = vpop.xlane.xlu0 %1505
        %v1507 = vmax.f32 %v1445, %v1447
        %1508 = vmax.xlane.f32.xlu0 %v1507
        %v1509 = vpop.xlane.xlu0 %1508
        %v1510 = vmax.f32 %v1449, %v1451
        %1511 = vmax.xlane.f32.xlu0 %v1510
        %v1512 = vpop.xlane.xlu0 %1511
        %v1513 = vmax.f32 %v1455, %v1457
        %1514 = vmax.xlane.f32.xlu0 %v1513
        %v1515 = vpop.xlane.xlu0 %1514
        %v1516 = vmax.f32 %v1459, %v1461
        %1517 = vmax.xlane.f32.xlu0 %v1516
        %v1518 = vpop.xlane.xlu0 %1517
        %v1519 = vmax.f32 %v1465, %v1467
        %1520 = vmax.xlane.f32.xlu0 %v1519
        %v1521 = vpop.xlane.xlu0 %1520
        %v1522 = vmax.f32 %v1469, %v1471
        %1523 = vmax.xlane.f32.xlu0 %v1522
        %v1524 = vpop.xlane.xlu0 %1523
        %v1525 = vmax.f32 %v1475, %v1477
        %1526 = vmax.xlane.f32.xlu0 %v1525
        %v1527 = vpop.xlane.xlu0 %1526
        %v1528 = vmax.f32 %v1479, %v1481
        %1529 = vmax.xlane.f32.xlu0 %v1528
        %v1530 = vpop.xlane.xlu0 %1529
        %v1531 = vsub.f32 %v1405, %v1485
        %v1532 = vsub.f32 %v1407, %v1485
        %v1533 = vsub.f32 %v1409, %v1488
        %v1534 = vsub.f32 %v1411, %v1488
        %v1535 = vsub.f32 %v1415, %v1491
        %v1536 = vsub.f32 %v1417, %v1491
        %v1537 = vsub.f32 %v1419, %v1494
        %v1538 = vsub.f32 %v1421, %v1494
        %v1539 = vsub.f32 %v1425, %v1497
        %v1540 = vsub.f32 %v1427, %v1497
        %v1541 = vsub.f32 %v1429, %v1500
        %v1542 = vsub.f32 %v1431, %v1500
        %v1543 = vsub.f32 %v1435, %v1503
        %v1544 = vsub.f32 %v1437, %v1503
        %v1545 = vsub.f32 %v1439, %v1506
        %v1546 = vsub.f32 %v1441, %v1506
        %v1547 = vsub.f32 %v1445, %v1509
        %v1548 = vsub.f32 %v1447, %v1509
        %v1549 = vsub.f32 %v1449, %v1512
        %v1550 = vsub.f32 %v1451, %v1512
        %v1551 = vsub.f32 %v1455, %v1515
        %v1552 = vsub.f32 %v1457, %v1515
        %v1553 = vsub.f32 %v1459, %v1518
        %v1554 = vsub.f32 %v1461, %v1518
        %v1555 = vsub.f32 %v1465, %v1521
        %v1556 = vsub.f32 %v1467, %v1521
        %v1557 = vsub.f32 %v1469, %v1524
        %v1558 = vsub.f32 %v1471, %v1524
        %v1559 = vsub.f32 %v1475, %v1527
        %v1560 = vsub.f32 %v1477, %v1527
        %v1561 = vsub.f32 %v1479, %v1530
        %v1562 = vsub.f32 %v1481, %v1530
        %v1563 = vmul.f32 %v1531, 1.442695
        %v1564 = vpow.pop %v1563
        %v1565 = vmul.f32 %v1532, 1.442695
        %v1566 = vpow.pop %v1565
        %v1567 = vmul.f32 %v1533, 1.442695
        %v1568 = vpow.pop %v1567
        %v1569 = vmul.f32 %v1534, 1.442695
        %v1570 = vpow.pop %v1569
        %v1571 = vmul.f32 %v1535, 1.442695
        %v1572 = vpow.pop %v1571
        %v1573 = vmul.f32 %v1536, 1.442695
        %v1574 = vpow.pop %v1573
        %v1575 = vmul.f32 %v1537, 1.442695
        %v1576 = vpow.pop %v1575
        %v1577 = vmul.f32 %v1538, 1.442695
        %v1578 = vpow.pop %v1577
        %v1579 = vmul.f32 %v1539, 1.442695
        %v1580 = vpow.pop %v1579
        %v1581 = vmul.f32 %v1540, 1.442695
        %v1582 = vpow.pop %v1581
        %v1583 = vmul.f32 %v1541, 1.442695
        %v1584 = vpow.pop %v1583
        %v1585 = vmul.f32 %v1542, 1.442695
        %v1586 = vpow.pop %v1585
        %v1587 = vmul.f32 %v1543, 1.442695
        %v1588 = vpow.pop %v1587
        %v1589 = vmul.f32 %v1544, 1.442695
        %v1590 = vpow.pop %v1589
        %v1591 = vmul.f32 %v1545, 1.442695
        %v1592 = vpow.pop %v1591
        %v1593 = vmul.f32 %v1546, 1.442695
        %v1594 = vpow.pop %v1593
        %v1595 = vmul.f32 %v1547, 1.442695
        %v1596 = vpow.pop %v1595
        %v1597 = vmul.f32 %v1548, 1.442695
        %v1598 = vpow.pop %v1597
        %v1599 = vmul.f32 %v1549, 1.442695
        %v1600 = vpow.pop %v1599
        %v1601 = vmul.f32 %v1550, 1.442695
        %v1602 = vpow.pop %v1601
        %v1603 = vmul.f32 %v1551, 1.442695
        %v1604 = vpow.pop %v1603
        %v1605 = vmul.f32 %v1552, 1.442695
        %v1606 = vpow.pop %v1605
        %v1607 = vmul.f32 %v1553, 1.442695
        %v1608 = vpow.pop %v1607
        %v1609 = vmul.f32 %v1554, 1.442695
        %v1610 = vpow.pop %v1609
        %v1611 = vmul.f32 %v1555, 1.442695
        %v1612 = vpow.pop %v1611
        %v1613 = vmul.f32 %v1556, 1.442695
        %v1614 = vpow.pop %v1613
        %v1615 = vmul.f32 %v1557, 1.442695
        %v1616 = vpow.pop %v1615
        %v1617 = vmul.f32 %v1558, 1.442695
        %v1618 = vpow.pop %v1617
        %v1619 = vmul.f32 %v1559, 1.442695
        %v1620 = vpow.pop %v1619
        %v1621 = vmul.f32 %v1560, 1.442695
        %v1622 = vpow.pop %v1621
        %v1623 = vmul.f32 %v1561, 1.442695
        %v1624 = vpow.pop %v1623
        %v1625 = vmul.f32 %v1562, 1.442695
        %v1626 = vpow.pop %v1625
        %v1627 = vadd.f32 %v1564, %v1566
        %1628 = vadd.xlane.f32.xlu0 %v1627
        %v1629 = vpop.xlane.xlu0 %1628
        %v1630 = vadd.f32 %v1568, %v1570
        %1631 = vadd.xlane.f32.xlu0 %v1630
        %v1632 = vpop.xlane.xlu0 %1631
        %v1633 = vadd.f32 %v1572, %v1574
        %1634 = vadd.xlane.f32.xlu0 %v1633
        %v1635 = vpop.xlane.xlu0 %1634
        %v1636 = vadd.f32 %v1576, %v1578
        %1637 = vadd.xlane.f32.xlu0 %v1636
        %v1638 = vpop.xlane.xlu0 %1637
        %v1639 = vadd.f32 %v1580, %v1582
        %1640 = vadd.xlane.f32.xlu0 %v1639
        %v1641 = vpop.xlane.xlu0 %1640
        %v1642 = vadd.f32 %v1584, %v1586
        %1643 = vadd.xlane.f32.xlu0 %v1642
        %v1644 = vpop.xlane.xlu0 %1643
        %v1645 = vadd.f32 %v1588, %v1590
        %1646 = vadd.xlane.f32.xlu0 %v1645
        %v1647 = vpop.xlane.xlu0 %1646
        %v1648 = vadd.f32 %v1592, %v1594
        %1649 = vadd.xlane.f32.xlu0 %v1648
        %v1650 = vpop.xlane.xlu0 %1649
        %v1651 = vadd.f32 %v1596, %v1598
        %1652 = vadd.xlane.f32.xlu0 %v1651
        %v1653 = vpop.xlane.xlu0 %1652
        %v1654 = vadd.f32 %v1600, %v1602
        %1655 = vadd.xlane.f32.xlu0 %v1654
        %v1656 = vpop.xlane.xlu0 %1655
        %v1657 = vadd.f32 %v1604, %v1606
        %1658 = vadd.xlane.f32.xlu0 %v1657
        %v1659 = vpop.xlane.xlu0 %1658
        %v1660 = vadd.f32 %v1608, %v1610
        %1661 = vadd.xlane.f32.xlu0 %v1660
        %v1662 = vpop.xlane.xlu0 %1661
        %v1663 = vadd.f32 %v1612, %v1614
        %1664 = vadd.xlane.f32.xlu0 %v1663
        %v1665 = vpop.xlane.xlu0 %1664
        %v1666 = vadd.f32 %v1616, %v1618
        %1667 = vadd.xlane.f32.xlu0 %v1666
        %v1668 = vpop.xlane.xlu0 %1667
        %v1669 = vadd.f32 %v1620, %v1622
        %1670 = vadd.xlane.f32.xlu0 %v1669
        %v1671 = vpop.xlane.xlu0 %1670
        %v1672 = vadd.f32 %v1624, %v1626
        %1673 = vadd.xlane.f32.xlu0 %v1672
        %v1674 = vpop.xlane.xlu0 %1673
        %v1675 = vrcp.pop %v1629
        %v1676 = vrcp.pop %v1632
        %v1677 = vrcp.pop %v1635
        %v1678 = vrcp.pop %v1638
        %v1679 = vrcp.pop %v1641
        %v1680 = vrcp.pop %v1644
        %v1681 = vrcp.pop %v1647
        %v1682 = vrcp.pop %v1650
        %v1683 = vrcp.pop %v1653
        %v1684 = vrcp.pop %v1656
        %v1685 = vrcp.pop %v1659
        %v1686 = vrcp.pop %v1662
        %v1687 = vrcp.pop %v1665
        %v1688 = vrcp.pop %v1668
        %v1689 = vrcp.pop %v1671
        %v1690 = vrcp.pop %v1674
        %v1691 = vmul.f32 %v1564, %v1675
        %v1692 = vmul.f32 %v1566, %v1675
        %v1693 = vmul.f32 %v1568, %v1676
        %v1694 = vmul.f32 %v1570, %v1676
        %v1695 = vmul.f32 %v1572, %v1677
        %v1696 = vmul.f32 %v1574, %v1677
        %v1697 = vmul.f32 %v1576, %v1678
        %v1698 = vmul.f32 %v1578, %v1678
        %v1699 = vmul.f32 %v1580, %v1679
        %v1700 = vmul.f32 %v1582, %v1679
        %v1701 = vmul.f32 %v1584, %v1680
        %v1702 = vmul.f32 %v1586, %v1680
        %v1703 = vmul.f32 %v1588, %v1681
        %v1704 = vmul.f32 %v1590, %v1681
        %v1705 = vmul.f32 %v1592, %v1682
        %v1706 = vmul.f32 %v1594, %v1682
        %v1707 = vmul.f32 %v1596, %v1683
        %v1708 = vmul.f32 %v1598, %v1683
        %v1709 = vmul.f32 %v1600, %v1684
        %v1710 = vmul.f32 %v1602, %v1684
        %v1711 = vmul.f32 %v1604, %v1685
        %v1712 = vmul.f32 %v1606, %v1685
        %v1713 = vmul.f32 %v1608, %v1686
        %v1714 = vmul.f32 %v1610, %v1686
        %v1715 = vmul.f32 %v1612, %v1687
        %v1716 = vmul.f32 %v1614, %v1687
        %v1717 = vmul.f32 %v1616, %v1688
        %v1718 = vmul.f32 %v1618, %v1688
        %v1719 = vmul.f32 %v1620, %v1689
        %v1720 = vmul.f32 %v1622, %v1689
        %v1721 = vmul.f32 %v1624, %v1690
        %v1722 = vmul.f32 %v1626, %v1690
        %v1723 = vpack.c.bf16 %v1693, %v1691
        %v1724 = vpack.c.bf16 %v1694, %v1692
        %v1725 = vpack.c.bf16 %v1697, %v1695
        %v1726 = vpack.c.bf16 %v1698, %v1696
        %v1727 = vpack.c.bf16 %v1701, %v1699
        %v1728 = vpack.c.bf16 %v1702, %v1700
        %v1729 = vpack.c.bf16 %v1705, %v1703
        %v1730 = vpack.c.bf16 %v1706, %v1704
        %v1731 = vpack.c.bf16 %v1709, %v1707
        %v1732 = vpack.c.bf16 %v1710, %v1708
        %v1733 = vpack.c.bf16 %v1713, %v1711
        %v1734 = vpack.c.bf16 %v1714, %v1712
        %v1735 = vpack.c.bf16 %v1717, %v1715
        %v1736 = vpack.c.bf16 %v1718, %v1716
        %v1737 = vpack.c.bf16 %v1721, %v1719
        %v1738 = vpack.c.bf16 %v1722, %v1720
        %v1739 = vld [vmem:[#allocation3] sm:$0xff]
        %v1740 = vld [vmem:[#allocation3 + $0x8] sm:$0xff]
        %v1741 = vld [vmem:[#allocation3 + $0x10] sm:$0xff]
        %v1742 = vld [vmem:[#allocation3 + $0x18] sm:$0xff]
        %v1743 = vld [vmem:[#allocation3 + $0x20] sm:$0xff]
        %v1744 = vld [vmem:[#allocation3 + $0x28] sm:$0xff]
        %v1745 = vld [vmem:[#allocation3 + $0x30] sm:$0xff]
        %v1746 = vld [vmem:[#allocation3 + $0x38] sm:$0xff]
        %v1747 = vld [vmem:[#allocation3 + $0x40] sm:$0xff]
        %v1748 = vld [vmem:[#allocation3 + $0x48] sm:$0xff]
        %v1749 = vld [vmem:[#allocation3 + $0x50] sm:$0xff]
        %v1750 = vld [vmem:[#allocation3 + $0x58] sm:$0xff]
        %v1751 = vld [vmem:[#allocation3 + $0x60] sm:$0xff]
        %v1752 = vld [vmem:[#allocation3 + $0x68] sm:$0xff]
        %v1753 = vld [vmem:[#allocation3 + $0x70] sm:$0xff]
        %v1754 = vld [vmem:[#allocation3 + $0x78] sm:$0xff]
        %v1755 = vld [vmem:[#allocation3 + $0x80] sm:$0xff]
        %v1756 = vld [vmem:[#allocation3 + $0x88] sm:$0xff]
        %v1757 = vld [vmem:[#allocation3 + $0x90] sm:$0xff]
        %v1758 = vld [vmem:[#allocation3 + $0x98] sm:$0xff]
        %v1759 = vld [vmem:[#allocation3 + $0xa0] sm:$0xff]
        %v1760 = vld [vmem:[#allocation3 + $0xa8] sm:$0xff]
        %v1761 = vld [vmem:[#allocation3 + $0xb0] sm:$0xff]
        %v1762 = vld [vmem:[#allocation3 + $0xb8] sm:$0xff]
        %v1763 = vld [vmem:[#allocation3 + $0xc0] sm:$0xff]
        %v1764 = vld [vmem:[#allocation3 + $0xc8] sm:$0xff]
        %v1765 = vld [vmem:[#allocation3 + $0xd0] sm:$0xff]
        %v1766 = vld [vmem:[#allocation3 + $0xd8] sm:$0xff]
        %v1767 = vld [vmem:[#allocation3 + $0xe0] sm:$0xff]
        %v1768 = vld [vmem:[#allocation3 + $0xe8] sm:$0xff]
        %v1769 = vld [vmem:[#allocation3 + $0xf0] sm:$0xff]
        %v1770 = vld [vmem:[#allocation3 + $0xf8] sm:$0xff]
        %1771 = vmatprep.subr.bf16.mxu0 %v1738
        %1772 = vmatpush1.bf16.msra.mxu0 %v1737
        %1773 = vmatprep.subr.bf16.mxu0 %v1736
        %1774 = vmatpush1.bf16.msra.mxu0 %v1735
        %1775 = vmatprep.subr.bf16.mxu0 %v1734
        %1776 = vmatpush1.bf16.msra.mxu0 %v1733
        %1777 = vmatprep.subr.bf16.mxu0 %v1732
        %1778 = vmatpush1.bf16.msra.mxu0 %v1731
        %1779 = vmatprep.subr.bf16.mxu0 %v1730
        %1780 = vmatpush1.bf16.msra.mxu0 %v1729
        %1781 = vmatprep.subr.bf16.mxu0 %v1728
        %1782 = vmatpush1.bf16.msra.mxu0 %v1727
        %1783 = vmatprep.subr.bf16.mxu0 %v1726
        %1784 = vmatpush1.bf16.msra.mxu0 %v1725
        %1785 = vmatprep.subr.bf16.mxu0 %v1724
        %1786 = vmatpush1.bf16.msra.mxu0 %v1723
        %1787 = vmatprep.subr.bf16.mxu0 0
        %1788 = vmatpush2.bf16.msra.mxu0 0
        %1789 = vmatprep.subr.bf16.mxu0 0
        %1790 = vmatpush2.bf16.msra.mxu0 0
        %1791 = vmatprep.subr.bf16.mxu0 0
        %1792 = vmatpush2.bf16.msra.mxu0 0
        %1793 = vmatprep.subr.bf16.mxu0 0
        %1794 = vmatpush2.bf16.msra.mxu0 0
        %1795 = vmatprep.subr.bf16.mxu0 0
        %1796 = vmatpush2.bf16.msra.mxu0 0
        %1797 = vmatprep.subr.bf16.mxu0 0
        %1798 = vmatpush2.bf16.msra.mxu0 0
        %1799 = vmatprep.subr.bf16.mxu0 0
        %1800 = vmatpush2.bf16.msra.mxu0 0
        %1801 = vmatprep.subr.bf16.mxu0 0
        %1802 = vmatpush2.bf16.msra.mxu0 0
        %1803 = vmatprep.mubr.bf16.mxu0 0
        %1804 = vmatmul.mubr.bf16.gmra.mxu0 %v1250
        %v1805 = vpop.f32.mrf.mxu0
        %v1806 = vadd.f32 0.0, %v1805
        %v1807 = vpop.f32.mrf.mxu0
        %v1808 = vadd.f32 0.0, %v1807
        %v1809 = vpop.f32.mrf.mxu0
        %v1810 = vadd.f32 0.0, %v1809
        %v1811 = vpop.f32.mrf.mxu0
        %v1812 = vadd.f32 0.0, %v1811
        %1813 = vmatprep.mubr.bf16.mxu0 0
        %1814 = vmatmul.mubr.bf16.gmra.mxu0 %v1251
        %v1815 = vpop.f32.mrf.mxu0
        %v1816 = vadd.f32 0.0, %v1815
        %v1817 = vpop.f32.mrf.mxu0
        %v1818 = vadd.f32 0.0, %v1817
        %v1819 = vpop.f32.mrf.mxu0
        %v1820 = vadd.f32 0.0, %v1819
        %v1821 = vpop.f32.mrf.mxu0
        %v1822 = vadd.f32 0.0, %v1821
        %1823 = vmatprep.mubr.bf16.mxu0 0
        %1824 = vmatmul.mubr.bf16.gmra.mxu0 %v1252
        %v1825 = vpop.f32.mrf.mxu0
        %v1826 = vadd.f32 0.0, %v1825
        %v1827 = vpop.f32.mrf.mxu0
        %v1828 = vadd.f32 0.0, %v1827
        %v1829 = vpop.f32.mrf.mxu0
        %v1830 = vadd.f32 0.0, %v1829
        %v1831 = vpop.f32.mrf.mxu0
        %v1832 = vadd.f32 0.0, %v1831
        %1833 = vmatprep.mubr.bf16.mxu0 0
        %1834 = vmatmul.mubr.bf16.gmra.mxu0 %v1253
        %v1835 = vpop.f32.mrf.mxu0
        %v1836 = vadd.f32 0.0, %v1835
        %v1837 = vpop.f32.mrf.mxu0
        %v1838 = vadd.f32 0.0, %v1837
        %v1839 = vpop.f32.mrf.mxu0
        %v1840 = vadd.f32 0.0, %v1839
        %v1841 = vpop.f32.mrf.mxu0
        %v1842 = vadd.f32 0.0, %v1841
        %1843 = vmatprep.mubr.bf16.mxu0 0
        %1844 = vmatmul.mubr.bf16.gmra.mxu0 %v1254
        %v1845 = vpop.f32.mrf.mxu0
        %v1846 = vadd.f32 0.0, %v1845
        %v1847 = vpop.f32.mrf.mxu0
        %v1848 = vadd.f32 0.0, %v1847
        %v1849 = vpop.f32.mrf.mxu0
        %v1850 = vadd.f32 0.0, %v1849
        %v1851 = vpop.f32.mrf.mxu0
        %v1852 = vadd.f32 0.0, %v1851
        %1853 = vmatprep.mubr.bf16.mxu0 0
        %1854 = vmatmul.mubr.bf16.gmra.mxu0 %v1255
        %v1855 = vpop.f32.mrf.mxu0
        %v1856 = vadd.f32 0.0, %v1855
        %v1857 = vpop.f32.mrf.mxu0
        %v1858 = vadd.f32 0.0, %v1857
        %v1859 = vpop.f32.mrf.mxu0
        %v1860 = vadd.f32 0.0, %v1859
        %v1861 = vpop.f32.mrf.mxu0
        %v1862 = vadd.f32 0.0, %v1861
        %1863 = vmatprep.mubr.bf16.mxu0 0
        %1864 = vmatmul.mubr.bf16.gmra.mxu0 %v1256
        %v1865 = vpop.f32.mrf.mxu0
        %v1866 = vadd.f32 0.0, %v1865
        %v1867 = vpop.f32.mrf.mxu0
        %v1868 = vadd.f32 0.0, %v1867
        %v1869 = vpop.f32.mrf.mxu0
        %v1870 = vadd.f32 0.0, %v1869
        %v1871 = vpop.f32.mrf.mxu0
        %v1872 = vadd.f32 0.0, %v1871
        %1873 = vmatprep.mubr.bf16.mxu0 0
        %1874 = vmatmul.mubr.bf16.gmra.mxu0 %v1257
        %v1875 = vpop.f32.mrf.mxu0
        %v1876 = vadd.f32 0.0, %v1875
        %v1877 = vpop.f32.mrf.mxu0
        %v1878 = vadd.f32 0.0, %v1877
        %v1879 = vpop.f32.mrf.mxu0
        %v1880 = vadd.f32 0.0, %v1879
        %v1881 = vpop.f32.mrf.mxu0
        %v1882 = vadd.f32 0.0, %v1881
        %1883 = vdwg.mxu0
        %v1884 = vadd.f32 %v1739, %v1806
        %v1885 = vadd.f32 %v1740, %v1808
        %v1886 = vadd.f32 %v1741, %v1810
        %v1887 = vadd.f32 %v1742, %v1812
        %v1888 = vadd.f32 %v1743, %v1816
        %v1889 = vadd.f32 %v1744, %v1818
        %v1890 = vadd.f32 %v1745, %v1820
        %v1891 = vadd.f32 %v1746, %v1822
        %v1892 = vadd.f32 %v1747, %v1826
        %v1893 = vadd.f32 %v1748, %v1828
        %v1894 = vadd.f32 %v1749, %v1830
        %v1895 = vadd.f32 %v1750, %v1832
        %v1896 = vadd.f32 %v1751, %v1836
        %v1897 = vadd.f32 %v1752, %v1838
        %v1898 = vadd.f32 %v1753, %v1840
        %v1899 = vadd.f32 %v1754, %v1842
        %v1900 = vadd.f32 %v1755, %v1846
        %v1901 = vadd.f32 %v1756, %v1848
        %v1902 = vadd.f32 %v1757, %v1850
        %v1903 = vadd.f32 %v1758, %v1852
        %v1904 = vadd.f32 %v1759, %v1856
        %v1905 = vadd.f32 %v1760, %v1858
        %v1906 = vadd.f32 %v1761, %v1860
        %v1907 = vadd.f32 %v1762, %v1862
        %v1908 = vadd.f32 %v1763, %v1866
        %v1909 = vadd.f32 %v1764, %v1868
        %v1910 = vadd.f32 %v1765, %v1870
        %v1911 = vadd.f32 %v1766, %v1872
        %v1912 = vadd.f32 %v1767, %v1876
        %v1913 = vadd.f32 %v1768, %v1878
        %v1914 = vadd.f32 %v1769, %v1880
        %v1915 = vadd.f32 %v1770, %v1882
        %1916 = vst [vmem:[#allocation3] sm:$0xff] %v1884
        %1917 = vst [vmem:[#allocation3 + $0x8] sm:$0xff] %v1885
        %1918 = vst [vmem:[#allocation3 + $0x10] sm:$0xff] %v1886
        %1919 = vst [vmem:[#allocation3 + $0x18] sm:$0xff] %v1887
        %1920 = vst [vmem:[#allocation3 + $0x20] sm:$0xff] %v1888
        %1921 = vst [vmem:[#allocation3 + $0x28] sm:$0xff] %v1889
        %1922 = vst [vmem:[#allocation3 + $0x30] sm:$0xff] %v1890
        %1923 = vst [vmem:[#allocation3 + $0x38] sm:$0xff] %v1891
        %1924 = vst [vmem:[#allocation3 + $0x40] sm:$0xff] %v1892
        %1925 = vst [vmem:[#allocation3 + $0x48] sm:$0xff] %v1893
        %1926 = vst [vmem:[#allocation3 + $0x50] sm:$0xff] %v1894
        %1927 = vst [vmem:[#allocation3 + $0x58] sm:$0xff] %v1895
        %1928 = vst [vmem:[#allocation3 + $0x60] sm:$0xff] %v1896
        %1929 = vst [vmem:[#allocation3 + $0x68] sm:$0xff] %v1897
        %1930 = vst [vmem:[#allocation3 + $0x70] sm:$0xff] %v1898
        %1931 = vst [vmem:[#allocation3 + $0x78] sm:$0xff] %v1899
        %1932 = vst [vmem:[#allocation3 + $0x80] sm:$0xff] %v1900
        %1933 = vst [vmem:[#allocation3 + $0x88] sm:$0xff] %v1901
        %1934 = vst [vmem:[#allocation3 + $0x90] sm:$0xff] %v1902
        %1935 = vst [vmem:[#allocation3 + $0x98] sm:$0xff] %v1903
        %1936 = vst [vmem:[#allocation3 + $0xa0] sm:$0xff] %v1904
        %1937 = vst [vmem:[#allocation3 + $0xa8] sm:$0xff] %v1905
        %1938 = vst [vmem:[#allocation3 + $0xb0] sm:$0xff] %v1906
        %1939 = vst [vmem:[#allocation3 + $0xb8] sm:$0xff] %v1907
        %1940 = vst [vmem:[#allocation3 + $0xc0] sm:$0xff] %v1908
        %1941 = vst [vmem:[#allocation3 + $0xc8] sm:$0xff] %v1909
        %1942 = vst [vmem:[#allocation3 + $0xd0] sm:$0xff] %v1910
        %1943 = vst [vmem:[#allocation3 + $0xd8] sm:$0xff] %v1911
        %1944 = vst [vmem:[#allocation3 + $0xe0] sm:$0xff] %v1912
        %1945 = vst [vmem:[#allocation3 + $0xe8] sm:$0xff] %v1913
        %1946 = vst [vmem:[#allocation3 + $0xf0] sm:$0xff] %v1914
        %1947 = vst [vmem:[#allocation3 + $0xf8] sm:$0xff] %v1915
        %p1948 = scmp.eq.s32.totalorder %s25, 1
        // Predicated region
        $region87: #{offset_attention.1} parent=77 // pred_check
          %p1949 = pneg %p1948
        $region88: #{offset_attention.1} parent=77 // pred_check_branch
          %1951 = sbr.rel (%p1949) target = $region90
        $region89: #{offset_attention.1} parent=77 // pred_region
          %v1952 = vld [vmem:[%s348] sm:$0xff]
          %v1953 = vld [vmem:[%s348 + $0x8] sm:$0xff]
          %v1954 = vld [vmem:[%s348 + $0x10] sm:$0xff]
          %v1955 = vld [vmem:[%s348 + $0x18] sm:$0xff]
          %v1956 = vld [vmem:[%s348 + $0x20] sm:$0xff]
          %v1957 = vld [vmem:[%s348 + $0x28] sm:$0xff]
          %v1958 = vld [vmem:[%s348 + $0x30] sm:$0xff]
          %v1959 = vld [vmem:[%s348 + $0x38] sm:$0xff]
          %v1960 = vld [vmem:[%s348 + $0x40] sm:$0xff]
          %v1961 = vld [vmem:[%s348 + $0x48] sm:$0xff]
          %v1962 = vld [vmem:[%s348 + $0x50] sm:$0xff]
          %v1963 = vld [vmem:[%s348 + $0x58] sm:$0xff]
          %v1964 = vld [vmem:[%s348 + $0x60] sm:$0xff]
          %v1965 = vld [vmem:[%s348 + $0x68] sm:$0xff]
          %v1966 = vld [vmem:[%s348 + $0x70] sm:$0xff]
          %v1967 = vld [vmem:[%s348 + $0x78] sm:$0xff]
          %v1968 = vld [vmem:[#allocation3] sm:$0xff]
          %v1969 = vld [vmem:[#allocation3 + $0x8] sm:$0xff]
          %v1970 = vld [vmem:[#allocation3 + $0x10] sm:$0xff]
          %v1971 = vld [vmem:[#allocation3 + $0x18] sm:$0xff]
          %v1972 = vld [vmem:[#allocation3 + $0x20] sm:$0xff]
          %v1973 = vld [vmem:[#allocation3 + $0x28] sm:$0xff]
          %v1974 = vld [vmem:[#allocation3 + $0x30] sm:$0xff]
          %v1975 = vld [vmem:[#allocation3 + $0x38] sm:$0xff]
          %v1976 = vld [vmem:[#allocation3 + $0x40] sm:$0xff]
          %v1977 = vld [vmem:[#allocation3 + $0x48] sm:$0xff]
          %v1978 = vld [vmem:[#allocation3 + $0x50] sm:$0xff]
          %v1979 = vld [vmem:[#allocation3 + $0x58] sm:$0xff]
          %v1980 = vld [vmem:[#allocation3 + $0x60] sm:$0xff]
          %v1981 = vld [vmem:[#allocation3 + $0x68] sm:$0xff]
          %v1982 = vld [vmem:[#allocation3 + $0x70] sm:$0xff]
          %v1983 = vld [vmem:[#allocation3 + $0x78] sm:$0xff]
          %v1984 = vld [vmem:[#allocation3 + $0x80] sm:$0xff]
          %v1985 = vld [vmem:[#allocation3 + $0x88] sm:$0xff]
          %v1986 = vadd.f32 %v1984, 1e-09
          %v1987 = vadd.f32 %v1985, 1e-09
          %v1988 = vrcp.pop %v1986
          %v1989 = vrcp.pop %v1987
          %v1990 = vlaneseq
          %v1991 = vshrl.u32 %v1990, 7
          %v1992 = vsub.s32 0, %v1991
          %v1993 = vrot.slane %v1988, %v1992
          %v1994 = vlaneseq
          %v1995 = vshrl.u32 %v1994, 7
          %v1996 = vsub.s32 0, %v1995
          %v1997 = vrot.slane %v1989, %v1996
          %v1998 = vmul.f32 %v1968, %v1993
          %v1999 = vmul.f32 %v1969, %v1997
          %v2000 = vmul.f32 %v1970, %v1993
          %v2001 = vmul.f32 %v1971, %v1997
          %v2002 = vmul.f32 %v1972, %v1993
          %v2003 = vmul.f32 %v1973, %v1997
          %v2004 = vmul.f32 %v1974, %v1993
          %v2005 = vmul.f32 %v1975, %v1997
          %v2006 = vmul.f32 %v1976, %v1993
          %v2007 = vmul.f32 %v1977, %v1997
          %v2008 = vmul.f32 %v1978, %v1993
          %v2009 = vmul.f32 %v1979, %v1997
          %v2010 = vmul.f32 %v1980, %v1993
          %v2011 = vmul.f32 %v1981, %v1997
          %v2012 = vmul.f32 %v1982, %v1993
          %v2013 = vmul.f32 %v1983, %v1997
          %v2014 = vsub.f32 %v1952, %v1998
          %v2015 = vsub.f32 %v1953, %v1999
          %v2016 = vsub.f32 %v1954, %v2000
          %v2017 = vsub.f32 %v1955, %v2001
          %v2018 = vsub.f32 %v1956, %v2002
          %v2019 = vsub.f32 %v1957, %v2003
          %v2020 = vsub.f32 %v1958, %v2004
          %v2021 = vsub.f32 %v1959, %v2005
          %v2022 = vsub.f32 %v1960, %v2006
          %v2023 = vsub.f32 %v1961, %v2007
          %v2024 = vsub.f32 %v1962, %v2008
          %v2025 = vsub.f32 %v1963, %v2009
          %v2026 = vsub.f32 %v1964, %v2010
          %v2027 = vsub.f32 %v1965, %v2011
          %v2028 = vsub.f32 %v1966, %v2012
          %v2029 = vsub.f32 %v1967, %v2013
          %v2030 = vpack.c.bf16 %v2016, %v2014
          %v2031 = vpack.c.bf16 %v2017, %v2015
          %v2032 = vpack.c.bf16 %v2020, %v2018
          %v2033 = vpack.c.bf16 %v2021, %v2019
          %v2034 = vpack.c.bf16 %v2024, %v2022
          %v2035 = vpack.c.bf16 %v2025, %v2023
          %v2036 = vpack.c.bf16 %v2028, %v2026
          %v2037 = vpack.c.bf16 %v2029, %v2027
          %v2038 = vld [vmem:[%s4] sm:$0xf]
          %v2039 = vld [vmem:[%s4 + $0x4] sm:$0xf]
          %v2040 = vld [vmem:[%s4 + $0x8] sm:$0xf]
          %v2041 = vld [vmem:[%s4 + $0xc] sm:$0xf]
          %v2042 = vld [vmem:[%s4 + $0x10] sm:$0xf]
          %v2043 = vld [vmem:[%s4 + $0x14] sm:$0xf]
          %v2044 = vld [vmem:[%s4 + $0x18] sm:$0xf]
          %v2045 = vld [vmem:[%s4 + $0x1c] sm:$0xf]
          %v2046 = vld [vmem:[%s5] sm:$0xff]
          %v2047 = vld [vmem:[%s5 + $0x8] sm:$0xff]
          %v2048 = vld [vmem:[%s5 + $0x10] sm:$0xff]
          %v2049 = vld [vmem:[%s5 + $0x18] sm:$0xff]
          %v2050 = vld [vmem:[%s5 + $0x20] sm:$0xff]
          %v2051 = vld [vmem:[%s5 + $0x28] sm:$0xff]
          %v2052 = vld [vmem:[%s5 + $0x30] sm:$0xff]
          %v2053 = vld [vmem:[%s5 + $0x38] sm:$0xff]
          %2055 = vset.pattern.permute.xlu0 0
          %2056 = vperm.xlu0 %2055, %v2046
          %v2057 = vpop.permute.xlu0 %2056
          %2060 = vset.pattern.permute.xlu0 0
          %2061 = vperm.xlu0 %2060, %v2047
          %v2062 = vpop.permute.xlu0 %2061
          %2065 = vset.pattern.permute.xlu0 0
          %2066 = vperm.xlu0 %2065, %v2048
          %v2067 = vpop.permute.xlu0 %2066
          %2070 = vset.pattern.permute.xlu0 0
          %2071 = vperm.xlu0 %2070, %v2049
          %v2072 = vpop.permute.xlu0 %2071
          %2075 = vset.pattern.permute.xlu0 0
          %2076 = vperm.xlu0 %2075, %v2050
          %v2077 = vpop.permute.xlu0 %2076
          %2080 = vset.pattern.permute.xlu0 0
          %2081 = vperm.xlu0 %2080, %v2051
          %v2082 = vpop.permute.xlu0 %2081
          %2085 = vset.pattern.permute.xlu0 0
          %2086 = vperm.xlu0 %2085, %v2052
          %v2087 = vpop.permute.xlu0 %2086
          %2090 = vset.pattern.permute.xlu0 0
          %2091 = vperm.xlu0 %2090, %v2053
          %v2092 = vpop.permute.xlu0 %2091
          %v2102 = vunpack.c.l.b16 %v2038
          %v2103 = vunpack.c.l.b16 %v2039
          %v2104 = vunpack.c.l.b16 %v2040
          %v2105 = vunpack.c.l.b16 %v2041
          %v2106 = vunpack.c.l.b16 %v2042
          %v2107 = vunpack.c.l.b16 %v2043
          %v2108 = vunpack.c.l.b16 %v2044
          %v2109 = vunpack.c.l.b16 %v2045
          %v2110 = vpack.c.b16 %v2103, %v2102
          %v2111 = vpack.c.b16 %v2105, %v2104
          %v2112 = vpack.c.b16 %v2107, %v2106
          %v2113 = vpack.c.b16 %v2109, %v2108
          %v2115 = vsel %vm1032, %v2110, 0
          %v2118 = vsel %vm1032, %v2111, 0
          %v2121 = vsel %vm1032, %v2112, 0
          %v2124 = vsel %vm1032, %v2113, 0
          %2126 = vmatprep.subr.bf16.mxu0 0
          %2127 = vmatpush1.bf16.msra.mxu0 0
          %2128 = vmatprep.subr.bf16.mxu0 0
          %2129 = vmatpush1.bf16.msra.mxu0 0
          %2130 = vmatprep.subr.bf16.mxu0 0
          %2131 = vmatpush1.bf16.msra.mxu0 0
          %2132 = vmatprep.subr.bf16.mxu0 0
          %2133 = vmatpush1.bf16.msra.mxu0 0
          %2134 = vmatprep.subr.bf16.mxu0 %v2037
          %2135 = vmatpush1.bf16.msra.mxu0 %v2036
          %2136 = vmatprep.subr.bf16.mxu0 %v2035
          %2137 = vmatpush1.bf16.msra.mxu0 %v2034
          %2138 = vmatprep.subr.bf16.mxu0 %v2033
          %2139 = vmatpush1.bf16.msra.mxu0 %v2032
          %2140 = vmatprep.subr.bf16.mxu0 %v2031
          %2141 = vmatpush1.bf16.msra.mxu0 %v2030
          %2142 = vmatprep.subr.bf16.mxu0 0
          %2143 = vmatpush2.bf16.msra.mxu0 0
          %2144 = vmatprep.subr.bf16.mxu0 0
          %2145 = vmatpush2.bf16.msra.mxu0 0
          %2146 = vmatprep.subr.bf16.mxu0 0
          %2147 = vmatpush2.bf16.msra.mxu0 0
          %2148 = vmatprep.subr.bf16.mxu0 0
          %2149 = vmatpush2.bf16.msra.mxu0 0
          %2150 = vmatprep.subr.bf16.mxu0 0
          %2151 = vmatpush2.bf16.msra.mxu0 0
          %2152 = vmatprep.subr.bf16.mxu0 0
          %2153 = vmatpush2.bf16.msra.mxu0 0
          %2154 = vmatprep.subr.bf16.mxu0 0
          %2155 = vmatpush2.bf16.msra.mxu0 0
          %2156 = vmatprep.subr.bf16.mxu0 0
          %2157 = vmatpush2.bf16.msra.mxu0 0
          %2158 = vmatprep.mubr.bf16.mxu0 0
          %2159 = vmatmul.mubr.bf16.gmra.mxu0 %v2115
          %v2160 = vpop.f32.mrf.mxu0
          %v2161 = vadd.f32 %v2057, %v2160
          %v2162 = vpop.f32.mrf.mxu0
          %v2163 = vadd.f32 %v2057, %v2162
          %v2164 = vpop.f32.mrf.mxu0
          %v2165 = vadd.f32 %v2062, %v2164
          %v2166 = vpop.f32.mrf.mxu0
          %v2167 = vadd.f32 %v2062, %v2166
          %2168 = vmatprep.mubr.bf16.mxu0 0
          %2169 = vmatmul.mubr.bf16.gmra.mxu0 %v2118
          %v2170 = vpop.f32.mrf.mxu0
          %v2171 = vadd.f32 %v2067, %v2170
          %v2172 = vpop.f32.mrf.mxu0
          %v2173 = vadd.f32 %v2067, %v2172
          %v2174 = vpop.f32.mrf.mxu0
          %v2175 = vadd.f32 %v2072, %v2174
          %v2176 = vpop.f32.mrf.mxu0
          %v2177 = vadd.f32 %v2072, %v2176
          %2178 = vmatprep.mubr.bf16.mxu0 0
          %2179 = vmatmul.mubr.bf16.gmra.mxu0 %v2121
          %v2180 = vpop.f32.mrf.mxu0
          %v2181 = vadd.f32 %v2077, %v2180
          %v2182 = vpop.f32.mrf.mxu0
          %v2183 = vadd.f32 %v2077, %v2182
          %v2184 = vpop.f32.mrf.mxu0
          %v2185 = vadd.f32 %v2082, %v2184
          %v2186 = vpop.f32.mrf.mxu0
          %v2187 = vadd.f32 %v2082, %v2186
          %2188 = vmatprep.mubr.bf16.mxu0 0
          %2189 = vmatmul.mubr.bf16.gmra.mxu0 %v2124
          %v2190 = vpop.f32.mrf.mxu0
          %v2191 = vadd.f32 %v2087, %v2190
          %v2192 = vpop.f32.mrf.mxu0
          %v2193 = vadd.f32 %v2087, %v2192
          %v2194 = vpop.f32.mrf.mxu0
          %v2195 = vadd.f32 %v2092, %v2194
          %v2196 = vpop.f32.mrf.mxu0
          %v2197 = vadd.f32 %v2092, %v2196
          %2198 = vdwg.mxu0
          %v2199 = vmul.f32 %v2161, 0.5
          %v2200 = vmul.f32 %v2163, 0.5
          %v2201 = vmul.f32 %v2165, 0.5
          %v2202 = vmul.f32 %v2167, 0.5
          %v2203 = vmul.f32 %v2171, 0.5
          %v2204 = vmul.f32 %v2173, 0.5
          %v2205 = vmul.f32 %v2175, 0.5
          %v2206 = vmul.f32 %v2177, 0.5
          %v2207 = vmul.f32 %v2181, 0.5
          %v2208 = vmul.f32 %v2183, 0.5
          %v2209 = vmul.f32 %v2185, 0.5
          %v2210 = vmul.f32 %v2187, 0.5
          %v2211 = vmul.f32 %v2191, 0.5
          %v2212 = vmul.f32 %v2193, 0.5
          %v2213 = vmul.f32 %v2195, 0.5
          %v2214 = vmul.f32 %v2197, 0.5
          %v2215 = vmul.f32 %v2161, 0.044715
          %v2216 = vmul.f32 %v2163, 0.044715
          %v2217 = vmul.f32 %v2165, 0.044715
          %v2218 = vmul.f32 %v2167, 0.044715
          %v2219 = vmul.f32 %v2171, 0.044715
          %v2220 = vmul.f32 %v2173, 0.044715
          %v2221 = vmul.f32 %v2175, 0.044715
          %v2222 = vmul.f32 %v2177, 0.044715
          %v2223 = vmul.f32 %v2181, 0.044715
          %v2224 = vmul.f32 %v2183, 0.044715
          %v2225 = vmul.f32 %v2185, 0.044715
          %v2226 = vmul.f32 %v2187, 0.044715
          %v2227 = vmul.f32 %v2191, 0.044715
          %v2228 = vmul.f32 %v2193, 0.044715
          %v2229 = vmul.f32 %v2195, 0.044715
          %v2230 = vmul.f32 %v2197, 0.044715
          %v2231 = vmul.f32 %v2215, %v2161
          %v2232 = vmul.f32 %v2216, %v2163
          %v2233 = vmul.f32 %v2217, %v2165
          %v2234 = vmul.f32 %v2218, %v2167
          %v2235 = vmul.f32 %v2219, %v2171
          %v2236 = vmul.f32 %v2220, %v2173
          %v2237 = vmul.f32 %v2221, %v2175
          %v2238 = vmul.f32 %v2222, %v2177
          %v2239 = vmul.f32 %v2223, %v2181
          %v2240 = vmul.f32 %v2224, %v2183
          %v2241 = vmul.f32 %v2225, %v2185
          %v2242 = vmul.f32 %v2226, %v2187
          %v2243 = vmul.f32 %v2227, %v2191
          %v2244 = vmul.f32 %v2228, %v2193
          %v2245 = vmul.f32 %v2229, %v2195
          %v2246 = vmul.f32 %v2230, %v2197
          %v2247 = vmul.f32 %v2231, %v2161
          %v2248 = vmul.f32 %v2232, %v2163
          %v2249 = vmul.f32 %v2233, %v2165
          %v2250 = vmul.f32 %v2234, %v2167
          %v2251 = vmul.f32 %v2235, %v2171
          %v2252 = vmul.f32 %v2236, %v2173
          %v2253 = vmul.f32 %v2237, %v2175
          %v2254 = vmul.f32 %v2238, %v2177
          %v2255 = vmul.f32 %v2239, %v2181
          %v2256 = vmul.f32 %v2240, %v2183
          %v2257 = vmul.f32 %v2241, %v2185
          %v2258 = vmul.f32 %v2242, %v2187
          %v2259 = vmul.f32 %v2243, %v2191
          %v2260 = vmul.f32 %v2244, %v2193
          %v2261 = vmul.f32 %v2245, %v2195
          %v2262 = vmul.f32 %v2246, %v2197
          %v2263 = vadd.f32 %v2161, %v2247
          %v2264 = vadd.f32 %v2163, %v2248
          %v2265 = vadd.f32 %v2165, %v2249
          %v2266 = vadd.f32 %v2167, %v2250
          %v2267 = vadd.f32 %v2171, %v2251
          %v2268 = vadd.f32 %v2173, %v2252
          %v2269 = vadd.f32 %v2175, %v2253
          %v2270 = vadd.f32 %v2177, %v2254
          %v2271 = vadd.f32 %v2181, %v2255
          %v2272 = vadd.f32 %v2183, %v2256
          %v2273 = vadd.f32 %v2185, %v2257
          %v2274 = vadd.f32 %v2187, %v2258
          %v2275 = vadd.f32 %v2191, %v2259
          %v2276 = vadd.f32 %v2193, %v2260
          %v2277 = vadd.f32 %v2195, %v2261
          %v2278 = vadd.f32 %v2197, %v2262
          %v2279 = vmul.f32 %v2263, 0.7978846
          %v2280 = vmul.f32 %v2264, 0.7978846
          %v2281 = vmul.f32 %v2265, 0.7978846
          %v2282 = vmul.f32 %v2266, 0.7978846
          %v2283 = vmul.f32 %v2267, 0.7978846
          %v2284 = vmul.f32 %v2268, 0.7978846
          %v2285 = vmul.f32 %v2269, 0.7978846
          %v2286 = vmul.f32 %v2270, 0.7978846
          %v2287 = vmul.f32 %v2271, 0.7978846
          %v2288 = vmul.f32 %v2272, 0.7978846
          %v2289 = vmul.f32 %v2273, 0.7978846
          %v2290 = vmul.f32 %v2274, 0.7978846
          %v2291 = vmul.f32 %v2275, 0.7978846
          %v2292 = vmul.f32 %v2276, 0.7978846
          %v2293 = vmul.f32 %v2277, 0.7978846
          %v2294 = vmul.f32 %v2278, 0.7978846
          %v2295 = vtanh.pop %v2279
          %v2296 = vtanh.pop %v2280
          %v2297 = vtanh.pop %v2281
          %v2298 = vtanh.pop %v2282
          %v2299 = vtanh.pop %v2283
          %v2300 = vtanh.pop %v2284
          %v2301 = vtanh.pop %v2285
          %v2302 = vtanh.pop %v2286
          %v2303 = vtanh.pop %v2287
          %v2304 = vtanh.pop %v2288
          %v2305 = vtanh.pop %v2289
          %v2306 = vtanh.pop %v2290
          %v2307 = vtanh.pop %v2291
          %v2308 = vtanh.pop %v2292
          %v2309 = vtanh.pop %v2293
          %v2310 = vtanh.pop %v2294
          %v2311 = vadd.f32 %v2295, 1.0
          %v2312 = vadd.f32 %v2296, 1.0
          %v2313 = vadd.f32 %v2297, 1.0
          %v2314 = vadd.f32 %v2298, 1.0
          %v2315 = vadd.f32 %v2299, 1.0
          %v2316 = vadd.f32 %v2300, 1.0
          %v2317 = vadd.f32 %v2301, 1.0
          %v2318 = vadd.f32 %v2302, 1.0
          %v2319 = vadd.f32 %v2303, 1.0
          %v2320 = vadd.f32 %v2304, 1.0
          %v2321 = vadd.f32 %v2305, 1.0
          %v2322 = vadd.f32 %v2306, 1.0
          %v2323 = vadd.f32 %v2307, 1.0
          %v2324 = vadd.f32 %v2308, 1.0
          %v2325 = vadd.f32 %v2309, 1.0
          %v2326 = vadd.f32 %v2310, 1.0
          %v2327 = vmul.f32 %v2199, %v2311
          %v2328 = vmul.f32 %v2200, %v2312
          %v2329 = vmul.f32 %v2201, %v2313
          %v2330 = vmul.f32 %v2202, %v2314
          %v2331 = vmul.f32 %v2203, %v2315
          %v2332 = vmul.f32 %v2204, %v2316
          %v2333 = vmul.f32 %v2205, %v2317
          %v2334 = vmul.f32 %v2206, %v2318
          %v2335 = vmul.f32 %v2207, %v2319
          %v2336 = vmul.f32 %v2208, %v2320
          %v2337 = vmul.f32 %v2209, %v2321
          %v2338 = vmul.f32 %v2210, %v2322
          %v2339 = vmul.f32 %v2211, %v2323
          %v2340 = vmul.f32 %v2212, %v2324
          %v2341 = vmul.f32 %v2213, %v2325
          %v2342 = vmul.f32 %v2214, %v2326
          %v2343 = vadd.f32 %v1952, %v2327
          %v2344 = vadd.f32 %v1953, %v2328
          %v2345 = vadd.f32 %v1954, %v2329
          %v2346 = vadd.f32 %v1955, %v2330
          %v2347 = vadd.f32 %v1956, %v2331
          %v2348 = vadd.f32 %v1957, %v2332
          %v2349 = vadd.f32 %v1958, %v2333
          %v2350 = vadd.f32 %v1959, %v2334
          %v2351 = vadd.f32 %v1960, %v2335
          %v2352 = vadd.f32 %v1961, %v2336
          %v2353 = vadd.f32 %v1962, %v2337
          %v2354 = vadd.f32 %v1963, %v2338
          %v2355 = vadd.f32 %v1964, %v2339
          %v2356 = vadd.f32 %v1965, %v2340
          %v2357 = vadd.f32 %v1966, %v2341
          %v2358 = vadd.f32 %v1967, %v2342
          %2359 = vst [vmem:[%s343] sm:$0xff] %v2343
          %2360 = vst [vmem:[%s343 + $0x8] sm:$0xff] %v2344
          %2361 = vst [vmem:[%s343 + $0x10] sm:$0xff] %v2345
          %2362 = vst [vmem:[%s343 + $0x18] sm:$0xff] %v2346
          %2363 = vst [vmem:[%s343 + $0x20] sm:$0xff] %v2347
          %2364 = vst [vmem:[%s343 + $0x28] sm:$0xff] %v2348
          %2365 = vst [vmem:[%s343 + $0x30] sm:$0xff] %v2349
          %2366 = vst [vmem:[%s343 + $0x38] sm:$0xff] %v2350
          %2367 = vst [vmem:[%s343 + $0x40] sm:$0xff] %v2351
          %2368 = vst [vmem:[%s343 + $0x48] sm:$0xff] %v2352
          %2369 = vst [vmem:[%s343 + $0x50] sm:$0xff] %v2353
          %2370 = vst [vmem:[%s343 + $0x58] sm:$0xff] %v2354
          %2371 = vst [vmem:[%s343 + $0x60] sm:$0xff] %v2355
          %2372 = vst [vmem:[%s343 + $0x68] sm:$0xff] %v2356
          %2373 = vst [vmem:[%s343 + $0x70] sm:$0xff] %v2357
          %2374 = vst [vmem:[%s343 + $0x78] sm:$0xff] %v2358
        $region90: #{offset_attention.1} parent=77 // pred_fallthru
          _
        %s2375 = sand.u32 %s178, 1
        %s2376 = scalar_lea.sflag [#allocation6], %s2375
        %s2377 = sand.u32 %s178, 1
        %s2378 = smul.addr %s2377, 128
        %s2379 = scalar_lea.vmem [#allocation5], %s2378
        // Predicated region
        $region91: #{offset_attention.1} parent=77 // pred_check
          %p2380 = pneg %p188
        $region92: #{offset_attention.1} parent=77 // pred_check_branch
          %2382 = sbr.rel (%p2380) target = $region94
        $region93: #{offset_attention.1} parent=77 // pred_region
          %s2384 = ssub.s32 2048, 2048
          %2385 = vsyncadd %s2376, %s2384
          %s2386 = smul.addr %s24, 16
          %s2387 = smul.addr %s2386, 128
          %s2388 = scalar_lea.hbm %s6, %s2387
          %s2389 = sshll.u32 %s2379, 4
          %s2390 = int_to_ptr.vmem [resolvable:$true] %s2389
          %2395 = dma.vmem_to_hbm [thread:$0]  %s2390, 2048, %s2388, %s2376, 256, 256, 16
        $region94: #{offset_attention.1} parent=77 // pred_fallthru
          _
      $region78: #{offset_attention.1} parent=5 // pred_fallthru
        _
      %p2396 = scmp.le.s32.totalorder 2, %s15
      // Predicated region
      $region95: #{offset_attention.1} parent=5 // pred_check
        %p2397 = pneg %p2396
      $region96: #{offset_attention.1} parent=5 // pred_check_branch
        %2399 = sbr.rel (%p2397) target = $region98
      $region97: #{offset_attention.1} parent=5 // pred_region
        %s2400 = ssub.s32 %s15, 2
        // Predicated region
        $region99: #{offset_attention.1} parent=97 // pred_check
          %p2401 = pneg %p194
        $region100: #{offset_attention.1} parent=97 // pred_check_branch
          %2403 = sbr.rel (%p2401) target = $region102
        $region101: #{offset_attention.1} parent=97 // pred_region
          %s2404 = sand.u32 %s179, 1
          %s2405 = scalar_lea.sflag [#allocation6], %s2404
          %s2406 = sand.u32 %s179, 1
          %s2407 = smul.addr %s2406, 128
          %s2408 = scalar_lea.vmem [#allocation5], %s2407
          %2409 = dma.done %s2405, 2048
        $region102: #{offset_attention.1} parent=97 // pred_fallthru
          _
      $region98: #{offset_attention.1} parent=5 // pred_fallthru
        _
    $region6: #{offset_attention.1} parent=1 // loop_footer
      %s19 = sadd.s32 1, %s15
    $region7: #{offset_attention.1} parent=1 // loop_footer_branch
      %14 = sbr.rel target = $region3
    $region8: #{offset_attention.1} parent=1 // loop_exit
      _
    %2410 = vsyncpa [#allocation6], 1
    %s2411 = scalar_lea.sflag [#allocation6], 1
    %2412 = vsyncpa %s2411, 1

</llo_original>
